<compile_context>
chip_gen: v7x
topology: tpu7x:2x2x1
jax: 0.10.0
libtpu: 0.0.40
codegen_flags: <defaults>
</compile_context>

<pallas_src>
import functools

import jax
import jax.numpy as jnp
from jax import lax
from jax.experimental import pallas as pl
from jax.experimental.pallas import tpu as pltpu


def pab_kernel(W_img, masks_ref, x_ref, w1_ref, w2_ref, wp1_ref, wp2_ref, o_ref):
    """PAB forward for a lane-dense (C, P) slab, P = B * H * W pixels.

    masks_ref : (9, P)   f32 per-tap validity mask (1 inside image, 0 where the
                         3x3 tap would read across an image border)
    x_ref     : (C, P)   B images concatenated along the lane axis
    w1_ref    : (C, 9C)  conv #1 weights, layout [co, (dy*3+dx)*C + ci]
    w2_ref    : (C, 9C)  conv #2 weights
    wp1_ref   : (Crp, C) PALayer 1x1 conv #1 (reduced dim zero-padded to Crp)
    wp2_ref   : (C, Crp) PALayer 1x1 conv #2
    o_ref     : (C, P)
    """
    P = x_ref.shape[-1]
    xv = x_ref[...].astype(jnp.float32)                     # (C, P)
    masks = masks_ref[...]                                  # (9, P)

    # Tap order must match the weight relayout: t = dy*3 + dx, flattened-pixel
    # offset d = (dy-1)*W + (dx-1).
    taps = tuple((dy - 1) * W_img + (dx - 1)
                 for dy in range(3) for dx in range(3))

    def conv3x3(src, w_ref):
        rows = []
        for t, d in enumerate(taps):
            if d == 0:
                rows.append(src)                 # centre tap: no shift, mask==1
            else:
                # roll is modular along the whole slab; every wrapped /
                # cross-image read is exactly a masked (zero-pad) position.
                shifted = pltpu.roll(src, shift=(-d) % P, axis=1)
                rows.append(shifted * masks[t:t + 1, :])
        im = jnp.concatenate(rows, axis=0)       # (9C, P) im2col operand
        return jnp.dot(w_ref[...], im, preferred_element_type=jnp.float32)

    # ---- body: conv3x3 -> ReLU -> conv3x3 ----
    h1 = jnp.maximum(conv3x3(xv, w1_ref), 0.0)
    res = conv3x3(h1, w2_ref)                               # (C, P)

    # ---- PALayer: 1x1 conv -> ReLU -> 1x1 conv -> sigmoid ----
    y1 = jnp.maximum(
        jnp.dot(wp1_ref[...], res, preferred_element_type=jnp.float32), 0.0)
    z = jnp.dot(wp2_ref[...], y1, preferred_element_type=jnp.float32)
    gate = 0.5 * (jnp.tanh(0.5 * z) + 1.0)       # sigmoid on the EUP

    # ---- residual add + ONE dense lane-aligned store ----
    o_ref[...] = (res * gate + xv).astype(o_ref.dtype)


def _images_per_step(N, HW):
    # Wide matmul N-dim per step (amortise ~0.35us step overhead & MXU drain),
    # capped so the (9C, B*HW) im2col value stays small.
    B = max(1, min(N, 2048 // HW))
    while N % B:
        B -= 1
    return B


@jax.jit
def pab_forward(x, w1, w2, wp1, wp2):
    """x: (N, C, H, W); w1, w2: (C, C, 3, 3) OIHW; wp1: (Cr, C); wp2: (C, Cr)."""
    N, C, H, W = x.shape
    HW = H * W
    B = _images_per_step(N, HW)
    P = B * HW
    Cr = wp1.shape[0]
    Crp = max(8, ((Cr + 7) // 8) * 8)            # pad the PA reduced dim

    # Weight relayout (host/XLA side, once per call):
    # OIHW (co, ci, dy, dx) -> (co, (dy*3+dx)*C + ci), matching the im2col rows.
    w1k = jnp.transpose(w1, (0, 2, 3, 1)).reshape(C, 9 * C).astype(jnp.float32)
    w2k = jnp.transpose(w2, (0, 2, 3, 1)).reshape(C, 9 * C).astype(jnp.float32)
    wp1p = jnp.zeros((Crp, C), jnp.float32).at[:Cr, :].set(wp1)
    wp2p = jnp.zeros((C, Crp), jnp.float32).at[:, :Cr].set(wp2)

    # Per-tap validity masks over the flattened H*W grid (exact SAME zero-pad),
    # tiled over the B images that share one grid step.
    ys = jnp.arange(H).reshape(H, 1)
    xs = jnp.arange(W).reshape(1, W)
    mask_rows = []
    for dy in range(3):
        for dx in range(3):
            ok = ((ys + dy - 1 >= 0) & (ys + dy - 1 < H) &
                  (xs + dx - 1 >= 0) & (xs + dx - 1 < W))
            mask_rows.append(ok.reshape(HW))
    masks = jnp.stack(mask_rows).astype(jnp.float32)        # (9, HW)
    masks = jnp.tile(masks, (1, B))                         # (9, P)

    # Lane-dense layout: (C, N*HW) with images concatenated along lanes.
    x2 = jnp.transpose(x.reshape(N, C, HW), (1, 0, 2)).reshape(C, N * HW)

    kernel = functools.partial(pab_kernel, W)
    out = pl.pallas_call(
        kernel,
        out_shape=jax.ShapeDtypeStruct((C, N * HW), x.dtype),
        grid_spec=pltpu.PrefetchScalarGridSpec(
            num_scalar_prefetch=0,
            grid=(N // B,),
            in_specs=[
                pl.BlockSpec((9, P), lambda n: (0, 0)),       # tap masks
                pl.BlockSpec((C, P), lambda n: (0, n)),       # input slab
                pl.BlockSpec((C, 9 * C), lambda n: (0, 0)),   # conv1 weights
                pl.BlockSpec((C, 9 * C), lambda n: (0, 0)),   # conv2 weights
                pl.BlockSpec((Crp, C), lambda n: (0, 0)),     # PA 1x1 #1
                pl.BlockSpec((C, Crp), lambda n: (0, 0)),     # PA 1x1 #2
            ],
            out_specs=pl.BlockSpec((C, P), lambda n: (0, n)),
        ),
        compiler_params=pltpu.CompilerParams(
            dimension_semantics=("parallel",),    # batch steps can split on v7x
        ),
    )(masks, x2, w1k, w2k, wp1p, wp2p)

    return jnp.transpose(out.reshape(C, N, HW), (1, 0, 2)).reshape(N, C, H, W)


def pab_reference(x, w1, w2, wp1, wp2):
    """Pure-JAX reference in NCHW / OIHW (PyTorch semantics)."""
    dn = ("NCHW", "OIHW", "NCHW")
    hp = lax.Precision.HIGHEST
    h1 = lax.conv_general_dilated(x, w1, (1, 1), "SAME",
                                  dimension_numbers=dn, precision=hp)
    h1 = jnp.maximum(h1, 0.0)
    res = lax.conv_general_dilated(h1, w2, (1, 1), "SAME",
                                   dimension_numbers=dn, precision=hp)
    y = jnp.maximum(jnp.einsum("rc,nchw->nrhw", wp1, res, precision=hp), 0.0)
    g = jax.nn.sigmoid(jnp.einsum("cr,nrhw->nchw", wp2, y, precision=hp))
    return res * g + x


if __name__ == "__main__":
    # Module config: PAB(n_feat=32, kernel_size=3, reduction=16, bias=False, act=ReLU)
    N, H, W = 2, 16, 16
    n_feat, reduction = 32, 16
    c_red = n_feat // reduction

    key = jax.random.PRNGKey(0)
    kx, k1, k2, k3, k4 = jax.random.split(key, 5)
    x = jax.random.normal(kx, (N, n_feat, H, W), jnp.float32)
    w1 = 0.05 * jax.random.normal(k1, (n_feat, n_feat, 3, 3), jnp.float32)  # OIHW
    w2 = 0.05 * jax.random.normal(k2, (n_feat, n_feat, 3, 3), jnp.float32)  # OIHW
    wp1 = 0.05 * jax.random.normal(k3, (c_red, n_feat), jnp.float32)
    wp2 = 0.05 * jax.random.normal(k4, (n_feat, c_red), jnp.float32)

    out = jax.block_until_ready(pab_forward(x, w1, w2, wp1, wp2))
    ref = pab_reference(x, w1, w2, wp1, wp2)
    assert out.shape == ref.shape == (N, n_feat, H, W)
    max_err = float(jnp.max(jnp.abs(out - ref)))
    assert jnp.allclose(out, ref, atol=1e-3, rtol=1e-3), max_err

    print("KERNEL_OK")
</pallas_src>

<mosaic_0001>
module attributes {stable_mosaic.version = 11 : i64} {
  func.func @pab_kernel(%arg0: i32, %arg1: memref<9x512xf32, #tpu.memory_space<vmem>>, %arg2: memref<32x512xf32, #tpu.memory_space<vmem>>, %arg3: memref<32x288xf32, #tpu.memory_space<vmem>>, %arg4: memref<32x288xf32, #tpu.memory_space<vmem>>, %arg5: memref<8x32xf32, #tpu.memory_space<vmem>>, %arg6: memref<32x8xf32, #tpu.memory_space<vmem>>, %arg7: memref<32x512xf32, #tpu.memory_space<vmem>>) attributes {dimension_semantics = [#tpu.dimension_semantics<parallel>], iteration_bounds = array<i64: 1>, scalar_prefetch = 0 : i64, scratch_operands = 0 : i64, tpu.core_type = #tpu.core_type<tc>, window_params = [{pipeline_mode = #tpu.pipeline_mode<synchronous>, transform_indices = @transform_0, window_bounds = array<i64: 9, 512>}, {transform_indices = @transform_1, window_bounds = array<i64: 32, 512>}, {pipeline_mode = #tpu.pipeline_mode<synchronous>, transform_indices = @transform_2, window_bounds = array<i64: 32, 288>}, {pipeline_mode = #tpu.pipeline_mode<synchronous>, transform_indices = @transform_3, window_bounds = array<i64: 32, 288>}, {pipeline_mode = #tpu.pipeline_mode<synchronous>, transform_indices = @transform_4, window_bounds = array<i64: 8, 32>}, {pipeline_mode = #tpu.pipeline_mode<synchronous>, transform_indices = @transform_5, window_bounds = array<i64: 32, 8>}, {transform_indices = @transform_6, window_bounds = array<i64: 32, 512>}]} {
    %c0 = arith.constant 0 : index
    %c0_0 = arith.constant 0 : index
    %0 = vector.load %arg2[%c0, %c0_0] : memref<32x512xf32, #tpu.memory_space<vmem>>, vector<32x512xf32>
    %c0_1 = arith.constant 0 : index
    %c0_2 = arith.constant 0 : index
    %1 = vector.load %arg1[%c0_1, %c0_2] : memref<9x512xf32, #tpu.memory_space<vmem>>, vector<9x512xf32>
    %c17_i32 = arith.constant 17 : i32
    %2 = tpu.dynamic_rotate %0 by %c17_i32 dim 1 : vector<32x512xf32>, i32 -> vector<32x512xf32>
    %3 = vector.extract_strided_slice %1 {offsets = [0, 0], sizes = [1, 512], strides = [1, 1]} : vector<9x512xf32> to vector<1x512xf32>
    %4 = vector.broadcast %3 : vector<1x512xf32> to vector<32x512xf32>
    %5 = arith.mulf %2, %4 : vector<32x512xf32>
    %c16_i32 = arith.constant 16 : i32
    %6 = tpu.dynamic_rotate %0 by %c16_i32 dim 1 : vector<32x512xf32>, i32 -> vector<32x512xf32>
    %7 = vector.extract_strided_slice %1 {offsets = [1, 0], sizes = [1, 512], strides = [1, 1]} : vector<9x512xf32> to vector<1x512xf32>
    %8 = vector.broadcast %7 : vector<1x512xf32> to vector<32x512xf32>
    %9 = arith.mulf %6, %8 : vector<32x512xf32>
    %c15_i32 = arith.constant 15 : i32
    %10 = tpu.dynamic_rotate %0 by %c15_i32 dim 1 : vector<32x512xf32>, i32 -> vector<32x512xf32>
    %11 = vector.extract_strided_slice %1 {offsets = [2, 0], sizes = [1, 512], strides = [1, 1]} : vector<9x512xf32> to vector<1x512xf32>
    %12 = vector.broadcast %11 : vector<1x512xf32> to vector<32x512xf32>
    %13 = arith.mulf %10, %12 : vector<32x512xf32>
    %c1_i32 = arith.constant 1 : i32
    %14 = tpu.dynamic_rotate %0 by %c1_i32 dim 1 : vector<32x512xf32>, i32 -> vector<32x512xf32>
    %15 = vector.extract_strided_slice %1 {offsets = [3, 0], sizes = [1, 512], strides = [1, 1]} : vector<9x512xf32> to vector<1x512xf32>
    %16 = vector.broadcast %15 : vector<1x512xf32> to vector<32x512xf32>
    %17 = arith.mulf %14, %16 : vector<32x512xf32>
    %c511_i32 = arith.constant 511 : i32
    %18 = tpu.dynamic_rotate %0 by %c511_i32 dim 1 : vector<32x512xf32>, i32 -> vector<32x512xf32>
    %19 = vector.extract_strided_slice %1 {offsets = [5, 0], sizes = [1, 512], strides = [1, 1]} : vector<9x512xf32> to vector<1x512xf32>
    %20 = vector.broadcast %19 : vector<1x512xf32> to vector<32x512xf32>
    %21 = arith.mulf %18, %20 : vector<32x512xf32>
    %c497_i32 = arith.constant 497 : i32
    %22 = tpu.dynamic_rotate %0 by %c497_i32 dim 1 : vector<32x512xf32>, i32 -> vector<32x512xf32>
    %23 = vector.extract_strided_slice %1 {offsets = [6, 0], sizes = [1, 512], strides = [1, 1]} : vector<9x512xf32> to vector<1x512xf32>
    %24 = vector.broadcast %23 : vector<1x512xf32> to vector<32x512xf32>
    %25 = arith.mulf %22, %24 : vector<32x512xf32>
    %c496_i32 = arith.constant 496 : i32
    %26 = tpu.dynamic_rotate %0 by %c496_i32 dim 1 : vector<32x512xf32>, i32 -> vector<32x512xf32>
    %27 = vector.extract_strided_slice %1 {offsets = [7, 0], sizes = [1, 512], strides = [1, 1]} : vector<9x512xf32> to vector<1x512xf32>
    %28 = vector.broadcast %27 : vector<1x512xf32> to vector<32x512xf32>
    %29 = arith.mulf %26, %28 : vector<32x512xf32>
    %c495_i32 = arith.constant 495 : i32
    %30 = tpu.dynamic_rotate %0 by %c495_i32 dim 1 : vector<32x512xf32>, i32 -> vector<32x512xf32>
    %31 = vector.extract_strided_slice %1 {offsets = [8, 0], sizes = [1, 512], strides = [1, 1]} : vector<9x512xf32> to vector<1x512xf32>
    %32 = vector.broadcast %31 : vector<1x512xf32> to vector<32x512xf32>
    %33 = arith.mulf %30, %32 : vector<32x512xf32>
    %34 = tpu.concatenate %5, %9, %13, %17, %0, %21, %25, %29, %33 in 0 : vector<32x512xf32>, vector<32x512xf32>, vector<32x512xf32>, vector<32x512xf32>, vector<32x512xf32>, vector<32x512xf32>, vector<32x512xf32>, vector<32x512xf32>, vector<32x512xf32> -> vector<288x512xf32>
    %c0_3 = arith.constant 0 : index
    %c0_4 = arith.constant 0 : index
    %35 = vector.load %arg3[%c0_3, %c0_4] : memref<32x288xf32, #tpu.memory_space<vmem>>, vector<32x288xf32>
    %cst = arith.constant dense<0.000000e+00> : vector<32x512xf32>
    %36 = tpu.matmul %35, %34, %cst {dimension_numbers = #tpu.dot_dimension_numbers<[1], [0], [0], [1], [0, 0, 1, 1], [], []>} : vector<32x288xf32>, vector<288x512xf32>, vector<32x512xf32> -> vector<32x512xf32>
    %cst_5 = arith.constant 0.000000e+00 : f32
    %37 = vector.broadcast %cst_5 : f32 to vector<32x512xf32>
    %38 = arith.maximumf %36, %37 : vector<32x512xf32>
    %c17_i32_6 = arith.constant 17 : i32
    %39 = tpu.dynamic_rotate %38 by %c17_i32_6 dim 1 : vector<32x512xf32>, i32 -> vector<32x512xf32>
    %40 = vector.extract_strided_slice %1 {offsets = [0, 0], sizes = [1, 512], strides = [1, 1]} : vector<9x512xf32> to vector<1x512xf32>
    %41 = vector.broadcast %40 : vector<1x512xf32> to vector<32x512xf32>
    %42 = arith.mulf %39, %41 : vector<32x512xf32>
    %c16_i32_7 = arith.constant 16 : i32
    %43 = tpu.dynamic_rotate %38 by %c16_i32_7 dim 1 : vector<32x512xf32>, i32 -> vector<32x512xf32>
    %44 = vector.extract_strided_slice %1 {offsets = [1, 0], sizes = [1, 512], strides = [1, 1]} : vector<9x512xf32> to vector<1x512xf32>
    %45 = vector.broadcast %44 : vector<1x512xf32> to vector<32x512xf32>
    %46 = arith.mulf %43, %45 : vector<32x512xf32>
    %c15_i32_8 = arith.constant 15 : i32
    %47 = tpu.dynamic_rotate %38 by %c15_i32_8 dim 1 : vector<32x512xf32>, i32 -> vector<32x512xf32>
    %48 = vector.extract_strided_slice %1 {offsets = [2, 0], sizes = [1, 512], strides = [1, 1]} : vector<9x512xf32> to vector<1x512xf32>
    %49 = vector.broadcast %48 : vector<1x512xf32> to vector<32x512xf32>
    %50 = arith.mulf %47, %49 : vector<32x512xf32>
    %c1_i32_9 = arith.constant 1 : i32
    %51 = tpu.dynamic_rotate %38 by %c1_i32_9 dim 1 : vector<32x512xf32>, i32 -> vector<32x512xf32>
    %52 = vector.extract_strided_slice %1 {offsets = [3, 0], sizes = [1, 512], strides = [1, 1]} : vector<9x512xf32> to vector<1x512xf32>
    %53 = vector.broadcast %52 : vector<1x512xf32> to vector<32x512xf32>
    %54 = arith.mulf %51, %53 : vector<32x512xf32>
    %c511_i32_10 = arith.constant 511 : i32
    %55 = tpu.dynamic_rotate %38 by %c511_i32_10 dim 1 : vector<32x512xf32>, i32 -> vector<32x512xf32>
    %56 = vector.extract_strided_slice %1 {offsets = [5, 0], sizes = [1, 512], strides = [1, 1]} : vector<9x512xf32> to vector<1x512xf32>
    %57 = vector.broadcast %56 : vector<1x512xf32> to vector<32x512xf32>
    %58 = arith.mulf %55, %57 : vector<32x512xf32>
    %c497_i32_11 = arith.constant 497 : i32
    %59 = tpu.dynamic_rotate %38 by %c497_i32_11 dim 1 : vector<32x512xf32>, i32 -> vector<32x512xf32>
    %60 = vector.extract_strided_slice %1 {offsets = [6, 0], sizes = [1, 512], strides = [1, 1]} : vector<9x512xf32> to vector<1x512xf32>
    %61 = vector.broadcast %60 : vector<1x512xf32> to vector<32x512xf32>
    %62 = arith.mulf %59, %61 : vector<32x512xf32>
    %c496_i32_12 = arith.constant 496 : i32
    %63 = tpu.dynamic_rotate %38 by %c496_i32_12 dim 1 : vector<32x512xf32>, i32 -> vector<32x512xf32>
    %64 = vector.extract_strided_slice %1 {offsets = [7, 0], sizes = [1, 512], strides = [1, 1]} : vector<9x512xf32> to vector<1x512xf32>
    %65 = vector.broadcast %64 : vector<1x512xf32> to vector<32x512xf32>
    %66 = arith.mulf %63, %65 : vector<32x512xf32>
    %c495_i32_13 = arith.constant 495 : i32
    %67 = tpu.dynamic_rotate %38 by %c495_i32_13 dim 1 : vector<32x512xf32>, i32 -> vector<32x512xf32>
    %68 = vector.extract_strided_slice %1 {offsets = [8, 0], sizes = [1, 512], strides = [1, 1]} : vector<9x512xf32> to vector<1x512xf32>
    %69 = vector.broadcast %68 : vector<1x512xf32> to vector<32x512xf32>
    %70 = arith.mulf %67, %69 : vector<32x512xf32>
    %71 = tpu.concatenate %42, %46, %50, %54, %38, %58, %62, %66, %70 in 0 : vector<32x512xf32>, vector<32x512xf32>, vector<32x512xf32>, vector<32x512xf32>, vector<32x512xf32>, vector<32x512xf32>, vector<32x512xf32>, vector<32x512xf32>, vector<32x512xf32> -> vector<288x512xf32>
    %c0_14 = arith.constant 0 : index
    %c0_15 = arith.constant 0 : index
    %72 = vector.load %arg4[%c0_14, %c0_15] : memref<32x288xf32, #tpu.memory_space<vmem>>, vector<32x288xf32>
    %cst_16 = arith.constant dense<0.000000e+00> : vector<32x512xf32>
    %73 = tpu.matmul %72, %71, %cst_16 {dimension_numbers = #tpu.dot_dimension_numbers<[1], [0], [0], [1], [0, 0, 1, 1], [], []>} : vector<32x288xf32>, vector<288x512xf32>, vector<32x512xf32> -> vector<32x512xf32>
    %c0_17 = arith.constant 0 : index
    %c0_18 = arith.constant 0 : index
    %74 = vector.load %arg5[%c0_17, %c0_18] : memref<8x32xf32, #tpu.memory_space<vmem>>, vector<8x32xf32>
    %cst_19 = arith.constant dense<0.000000e+00> : vector<8x512xf32>
    %75 = tpu.matmul %74, %73, %cst_19 {dimension_numbers = #tpu.dot_dimension_numbers<[1], [0], [0], [1], [0, 0, 1, 1], [], []>} : vector<8x32xf32>, vector<32x512xf32>, vector<8x512xf32> -> vector<8x512xf32>
    %cst_20 = arith.constant 0.000000e+00 : f32
    %76 = vector.broadcast %cst_20 : f32 to vector<8x512xf32>
    %77 = arith.maximumf %75, %76 : vector<8x512xf32>
    %c0_21 = arith.constant 0 : index
    %c0_22 = arith.constant 0 : index
    %78 = vector.load %arg6[%c0_21, %c0_22] : memref<32x8xf32, #tpu.memory_space<vmem>>, vector<32x8xf32>
    %cst_23 = arith.constant dense<0.000000e+00> : vector<32x512xf32>
    %79 = tpu.matmul %78, %77, %cst_23 {dimension_numbers = #tpu.dot_dimension_numbers<[1], [0], [0], [1], [0, 0, 1, 1], [], []>} : vector<32x8xf32>, vector<8x512xf32>, vector<32x512xf32> -> vector<32x512xf32>
    %cst_24 = arith.constant 5.000000e-01 : f32
    %80 = vector.broadcast %cst_24 : f32 to vector<32x512xf32>
    %81 = arith.mulf %80, %79 : vector<32x512xf32>
    %82 = math.tanh %81 : vector<32x512xf32>
    %cst_25 = arith.constant 1.000000e+00 : f32
    %83 = vector.broadcast %cst_25 : f32 to vector<32x512xf32>
    %84 = arith.addf %82, %83 : vector<32x512xf32>
    %cst_26 = arith.constant 5.000000e-01 : f32
    %85 = vector.broadcast %cst_26 : f32 to vector<32x512xf32>
    %86 = arith.mulf %85, %84 : vector<32x512xf32>
    %87 = arith.mulf %73, %86 : vector<32x512xf32>
    %88 = arith.addf %87, %0 : vector<32x512xf32>
    %c0_27 = arith.constant 0 : index
    %c0_28 = arith.constant 0 : index
    %89 = vector.load %arg7[%c0_27, %c0_28] : memref<32x512xf32, #tpu.memory_space<vmem>>, vector<32x512xf32>
    tpu.vector_store %arg7[%c0_27, %c0_28], %88 {strides = array<i32>} : memref<32x512xf32, #tpu.memory_space<vmem>>, vector<32x512xf32>,
    return
  }
  func.func @transform_0(%arg0: i32) -> (i32, i32) {
    %c0_i32 = arith.constant 0 : i32
    %c0_i32_0 = arith.constant 0 : i32
    %c0_i32_1 = arith.constant 0 : i32
    return %c0_i32, %c0_i32_0 : i32, i32
  }
  func.func @transform_1(%arg0: i32) -> (i32, i32) {
    %c0_i32 = arith.constant 0 : i32
    %c0_i32_0 = arith.constant 0 : i32
    return %c0_i32, %arg0 : i32, i32
  }
  func.func @transform_2(%arg0: i32) -> (i32, i32) {
    %c0_i32 = arith.constant 0 : i32
    %c0_i32_0 = arith.constant 0 : i32
    %c0_i32_1 = arith.constant 0 : i32
    return %c0_i32, %c0_i32_0 : i32, i32
  }
  func.func @transform_3(%arg0: i32) -> (i32, i32) {
    %c0_i32 = arith.constant 0 : i32
    %c0_i32_0 = arith.constant 0 : i32
    %c0_i32_1 = arith.constant 0 : i32
    return %c0_i32, %c0_i32_0 : i32, i32
  }
  func.func @transform_4(%arg0: i32) -> (i32, i32) {
    %c0_i32 = arith.constant 0 : i32
    %c0_i32_0 = arith.constant 0 : i32
    %c0_i32_1 = arith.constant 0 : i32
    return %c0_i32, %c0_i32_0 : i32, i32
  }
  func.func @transform_5(%arg0: i32) -> (i32, i32) {
    %c0_i32 = arith.constant 0 : i32
    %c0_i32_0 = arith.constant 0 : i32
    %c0_i32_1 = arith.constant 0 : i32
    return %c0_i32, %c0_i32_0 : i32, i32
  }
  func.func @transform_6(%arg0: i32) -> (i32, i32) {
    %c0_i32 = arith.constant 0 : i32
    %c0_i32_0 = arith.constant 0 : i32
    return %c0_i32, %arg0 : i32, i32
  }
}

</mosaic_0001>

<llo_original>
// kernel: pab_forward.1
$region0: #{pab_forward.1}
  #allocation0 [shape = 'u32[]', space=smem, size = 0x4, offset = 0x4, fixed_abs, tag = 'smem constant byte address 0x4 - core index']
  #allocation1 [shape = 'u32[144,128]{1,0:T(1,128)}', space=vmem, size = 0x12000, scoped, tag = 'internal scratch']
  %s0 = inlined_call_operand.vmem [shape: f32[9,512], index: 0, kind: input, shape index: {}]
  %s1 = inlined_call_operand.vmem [shape: f32[32,512], index: 1, kind: input, shape index: {}]
  %s2 = inlined_call_operand.vmem [shape: f32[32,288], index: 2, kind: input, shape index: {}]
  %s3 = inlined_call_operand.vmem [shape: f32[32,288], index: 3, kind: input, shape index: {}]
  %s4 = inlined_call_operand.vmem [shape: f32[8,32], index: 4, kind: input, shape index: {}]
  %s5 = inlined_call_operand.vmem [shape: f32[32,8], index: 5, kind: input, shape index: {}]
  %s6 = inlined_call_operand.vmem [shape: f32[32,512], index: 6, kind: output, shape index: {}]
  %s7 = sld [smem:[#allocation0]]
  $region34: #{pab_forward.1} parent=0
    _
  %s9 = ssub.s32 1, %s7
  %s10 = scalar_select 0, %s9, %s7
  // Predicated region
  $region2: #{pab_forward.1} parent=0 // pred_check
    _
  $region3: #{pab_forward.1} parent=0 // pred_check_branch
    %12 = sbr.rel (0) target = $region5
  $region4: #{pab_forward.1} parent=0 // pred_region
    _
  $region5: #{pab_forward.1} parent=0 // pred_fallthru
    _
  // Predicated region
  $region6: #{pab_forward.1} parent=0 // pred_check
    _
  $region7: #{pab_forward.1} parent=0 // pred_check_branch
    %14 = sbr.rel (0) target = $region9
  $region8: #{pab_forward.1} parent=0 // pred_region
    _
  $region9: #{pab_forward.1} parent=0 // pred_fallthru
    _
  // Predicated region
  $region10: #{pab_forward.1} parent=0 // pred_check
    _
  $region11: #{pab_forward.1} parent=0 // pred_check_branch
    %16 = sbr.rel (0) target = $region13
  $region12: #{pab_forward.1} parent=0 // pred_region
    _
  $region13: #{pab_forward.1} parent=0 // pred_fallthru
    _
  // Predicated region
  $region14: #{pab_forward.1} parent=0 // pred_check
    _
  $region15: #{pab_forward.1} parent=0 // pred_check_branch
    %18 = sbr.rel (0) target = $region17
  $region16: #{pab_forward.1} parent=0 // pred_region
    _
  $region17: #{pab_forward.1} parent=0 // pred_fallthru
    _
  // Predicated region
  $region18: #{pab_forward.1} parent=0 // pred_check
    _
  $region19: #{pab_forward.1} parent=0 // pred_check_branch
    %20 = sbr.rel (0) target = $region21
  $region20: #{pab_forward.1} parent=0 // pred_region
    _
  $region21: #{pab_forward.1} parent=0 // pred_fallthru
    _
  // Predicated region
  $region22: #{pab_forward.1} parent=0 // pred_check
    _
  $region23: #{pab_forward.1} parent=0 // pred_check_branch
    %22 = sbr.rel (0) target = $region25
  $region24: #{pab_forward.1} parent=0 // pred_region
    _
  $region25: #{pab_forward.1} parent=0 // pred_fallthru
    _
  %v23 = vld [vmem:[%s1] sm:$0xff]
  %v24 = vld [vmem:[%s1 + $0x8] sm:$0xff]
  %v25 = vld [vmem:[%s1 + $0x10] sm:$0xff]
  %v26 = vld [vmem:[%s1 + $0x18] sm:$0xff]
  %v27 = vld [vmem:[%s1 + $0x20] sm:$0xff]
  %v28 = vld [vmem:[%s1 + $0x28] sm:$0xff]
  %v29 = vld [vmem:[%s1 + $0x30] sm:$0xff]
  %v30 = vld [vmem:[%s1 + $0x38] sm:$0xff]
  %v31 = vld [vmem:[%s1 + $0x40] sm:$0xff]
  %v32 = vld [vmem:[%s1 + $0x48] sm:$0xff]
  %v33 = vld [vmem:[%s1 + $0x50] sm:$0xff]
  %v34 = vld [vmem:[%s1 + $0x58] sm:$0xff]
  %v35 = vld [vmem:[%s1 + $0x60] sm:$0xff]
  %v36 = vld [vmem:[%s1 + $0x68] sm:$0xff]
  %v37 = vld [vmem:[%s1 + $0x70] sm:$0xff]
  %v38 = vld [vmem:[%s1 + $0x78] sm:$0xff]
  %v39 = vld [vmem:[%s0] sm:$0xff]
  %v40 = vld [vmem:[%s0 + $0x8] sm:$0xff]
  %v41 = vld [vmem:[%s0 + $0x10] sm:$0xff]
  %v42 = vld [vmem:[%s0 + $0x18] sm:$0xff]
  %v43 = vld [vmem:[%s0 + $0x20] sm:$0x1]
  %v44 = vld [vmem:[%s0 + $0x28] sm:$0x1]
  %v45 = vld [vmem:[%s0 + $0x30] sm:$0x1]
  %v46 = vld [vmem:[%s0 + $0x38] sm:$0x1]
  %47 = vrot.lane.b32.xlu0 %v23, 17
  %v48 = vpop.permute.xlu0 %47
  %49 = vrot.lane.b32.xlu0 %v27, 17
  %v50 = vpop.permute.xlu0 %49
  %51 = vrot.lane.b32.xlu0 %v31, 17
  %v52 = vpop.permute.xlu0 %51
  %53 = vrot.lane.b32.xlu0 %v35, 17
  %v54 = vpop.permute.xlu0 %53
  %55 = vrot.lane.b32.xlu0 %v24, 17
  %v56 = vpop.permute.xlu0 %55
  %57 = vrot.lane.b32.xlu0 %v28, 17
  %v58 = vpop.permute.xlu0 %57
  %59 = vrot.lane.b32.xlu0 %v32, 17
  %v60 = vpop.permute.xlu0 %59
  %61 = vrot.lane.b32.xlu0 %v36, 17
  %v62 = vpop.permute.xlu0 %61
  %63 = vrot.lane.b32.xlu0 %v25, 17
  %v64 = vpop.permute.xlu0 %63
  %65 = vrot.lane.b32.xlu0 %v29, 17
  %v66 = vpop.permute.xlu0 %65
  %67 = vrot.lane.b32.xlu0 %v33, 17
  %v68 = vpop.permute.xlu0 %67
  %69 = vrot.lane.b32.xlu0 %v37, 17
  %v70 = vpop.permute.xlu0 %69
  %71 = vrot.lane.b32.xlu0 %v26, 17
  %v72 = vpop.permute.xlu0 %71
  %73 = vrot.lane.b32.xlu0 %v30, 17
  %v74 = vpop.permute.xlu0 %73
  %75 = vrot.lane.b32.xlu0 %v34, 17
  %v76 = vpop.permute.xlu0 %75
  %77 = vrot.lane.b32.xlu0 %v38, 17
  %v78 = vpop.permute.xlu0 %77
  %v79 = vlaneseq
  %v80 = vand.u32 %v79, 127
  %vm81 = vcmp.lt.s32.totalorder %v80, 17
  %v82 = vsel %vm81, %v64, %v72
  %v83 = vsel %vm81, %v66, %v74
  %v84 = vsel %vm81, %v68, %v76
  %v85 = vsel %vm81, %v70, %v78
  %v86 = vsel %vm81, %v56, %v64
  %v87 = vsel %vm81, %v58, %v66
  %v88 = vsel %vm81, %v60, %v68
  %v89 = vsel %vm81, %v62, %v70
  %v90 = vsel %vm81, %v48, %v56
  %v91 = vsel %vm81, %v50, %v58
  %v92 = vsel %vm81, %v52, %v60
  %v93 = vsel %vm81, %v54, %v62
  %v94 = vsel %vm81, %v72, %v48
  %v95 = vsel %vm81, %v74, %v50
  %v96 = vsel %vm81, %v76, %v52
  %v97 = vsel %vm81, %v78, %v54
  %v98 = vlaneseq
  %v99 = vshrl.u32 %v98, 7
  %v100 = vsub.s32 0, %v99
  %v101 = vrot.slane %v39, %v100
  %v102 = vlaneseq
  %v103 = vshrl.u32 %v102, 7
  %v104 = vsub.s32 0, %v103
  %v105 = vrot.slane %v40, %v104
  %v106 = vlaneseq
  %v107 = vshrl.u32 %v106, 7
  %v108 = vsub.s32 0, %v107
  %v109 = vrot.slane %v41, %v108
  %v110 = vlaneseq
  %v111 = vshrl.u32 %v110, 7
  %v112 = vsub.s32 0, %v111
  %v113 = vrot.slane %v42, %v112
  %v114 = vmul.f32 %v94, %v101
  %v115 = vmul.f32 %v90, %v105
  %v116 = vmul.f32 %v86, %v109
  %v117 = vmul.f32 %v82, %v113
  %v118 = vmul.f32 %v95, %v101
  %v119 = vmul.f32 %v91, %v105
  %v120 = vmul.f32 %v87, %v109
  %v121 = vmul.f32 %v83, %v113
  %v122 = vmul.f32 %v96, %v101
  %v123 = vmul.f32 %v92, %v105
  %v124 = vmul.f32 %v88, %v109
  %v125 = vmul.f32 %v84, %v113
  %v126 = vmul.f32 %v97, %v101
  %v127 = vmul.f32 %v93, %v105
  %v128 = vmul.f32 %v89, %v109
  %v129 = vmul.f32 %v85, %v113
  %130 = vrot.lane.b32.xlu0 %v23, 16
  %v131 = vpop.permute.xlu0 %130
  %132 = vrot.lane.b32.xlu0 %v27, 16
  %v133 = vpop.permute.xlu0 %132
  %134 = vrot.lane.b32.xlu0 %v31, 16
  %v135 = vpop.permute.xlu0 %134
  %136 = vrot.lane.b32.xlu0 %v35, 16
  %v137 = vpop.permute.xlu0 %136
  %138 = vrot.lane.b32.xlu0 %v24, 16
  %v139 = vpop.permute.xlu0 %138
  %140 = vrot.lane.b32.xlu0 %v28, 16
  %v141 = vpop.permute.xlu0 %140
  %142 = vrot.lane.b32.xlu0 %v32, 16
  %v143 = vpop.permute.xlu0 %142
  %144 = vrot.lane.b32.xlu0 %v36, 16
  %v145 = vpop.permute.xlu0 %144
  %146 = vrot.lane.b32.xlu0 %v25, 16
  %v147 = vpop.permute.xlu0 %146
  %148 = vrot.lane.b32.xlu0 %v29, 16
  %v149 = vpop.permute.xlu0 %148
  %150 = vrot.lane.b32.xlu0 %v33, 16
  %v151 = vpop.permute.xlu0 %150
  %152 = vrot.lane.b32.xlu0 %v37, 16
  %v153 = vpop.permute.xlu0 %152
  %154 = vrot.lane.b32.xlu0 %v26, 16
  %v155 = vpop.permute.xlu0 %154
  %156 = vrot.lane.b32.xlu0 %v30, 16
  %v157 = vpop.permute.xlu0 %156
  %158 = vrot.lane.b32.xlu0 %v34, 16
  %v159 = vpop.permute.xlu0 %158
  %160 = vrot.lane.b32.xlu0 %v38, 16
  %v161 = vpop.permute.xlu0 %160
  %vm162 = vcmp.lt.s32.totalorder %v80, 16
  %v163 = vsel %vm162, %v147, %v155
  %v164 = vsel %vm162, %v149, %v157
  %v165 = vsel %vm162, %v151, %v159
  %v166 = vsel %vm162, %v153, %v161
  %v167 = vsel %vm162, %v139, %v147
  %v168 = vsel %vm162, %v141, %v149
  %v169 = vsel %vm162, %v143, %v151
  %v170 = vsel %vm162, %v145, %v153
  %v171 = vsel %vm162, %v131, %v139
  %v172 = vsel %vm162, %v133, %v141
  %v173 = vsel %vm162, %v135, %v143
  %v174 = vsel %vm162, %v137, %v145
  %v175 = vsel %vm162, %v155, %v131
  %v176 = vsel %vm162, %v157, %v133
  %v177 = vsel %vm162, %v159, %v135
  %v178 = vsel %vm162, %v161, %v137
  %v179 = vlaneseq
  %v180 = vshrl.u32 %v179, 7
  %v181 = vsub.s32 1, %v180
  %v182 = vrot.slane %v39, %v181
  %v183 = vlaneseq
  %v184 = vshrl.u32 %v183, 7
  %v185 = vsub.s32 1, %v184
  %v186 = vrot.slane %v40, %v185
  %v187 = vlaneseq
  %v188 = vshrl.u32 %v187, 7
  %v189 = vsub.s32 1, %v188
  %v190 = vrot.slane %v41, %v189
  %v191 = vlaneseq
  %v192 = vshrl.u32 %v191, 7
  %v193 = vsub.s32 1, %v192
  %v194 = vrot.slane %v42, %v193
  %v195 = vmul.f32 %v175, %v182
  %v196 = vmul.f32 %v171, %v186
  %v197 = vmul.f32 %v167, %v190
  %v198 = vmul.f32 %v163, %v194
  %v199 = vmul.f32 %v176, %v182
  %v200 = vmul.f32 %v172, %v186
  %v201 = vmul.f32 %v168, %v190
  %v202 = vmul.f32 %v164, %v194
  %v203 = vmul.f32 %v177, %v182
  %v204 = vmul.f32 %v173, %v186
  %v205 = vmul.f32 %v169, %v190
  %v206 = vmul.f32 %v165, %v194
  %v207 = vmul.f32 %v178, %v182
  %v208 = vmul.f32 %v174, %v186
  %v209 = vmul.f32 %v170, %v190
  %v210 = vmul.f32 %v166, %v194
  %211 = vrot.lane.b32.xlu0 %v23, 15
  %v212 = vpop.permute.xlu0 %211
  %213 = vrot.lane.b32.xlu0 %v27, 15
  %v214 = vpop.permute.xlu0 %213
  %215 = vrot.lane.b32.xlu0 %v31, 15
  %v216 = vpop.permute.xlu0 %215
  %217 = vrot.lane.b32.xlu0 %v35, 15
  %v218 = vpop.permute.xlu0 %217
  %219 = vrot.lane.b32.xlu0 %v24, 15
  %v220 = vpop.permute.xlu0 %219
  %221 = vrot.lane.b32.xlu0 %v28, 15
  %v222 = vpop.permute.xlu0 %221
  %223 = vrot.lane.b32.xlu0 %v32, 15
  %v224 = vpop.permute.xlu0 %223
  %225 = vrot.lane.b32.xlu0 %v36, 15
  %v226 = vpop.permute.xlu0 %225
  %227 = vrot.lane.b32.xlu0 %v25, 15
  %v228 = vpop.permute.xlu0 %227
  %229 = vrot.lane.b32.xlu0 %v29, 15
  %v230 = vpop.permute.xlu0 %229
  %231 = vrot.lane.b32.xlu0 %v33, 15
  %v232 = vpop.permute.xlu0 %231
  %233 = vrot.lane.b32.xlu0 %v37, 15
  %v234 = vpop.permute.xlu0 %233
  %235 = vrot.lane.b32.xlu0 %v26, 15
  %v236 = vpop.permute.xlu0 %235
  %237 = vrot.lane.b32.xlu0 %v30, 15
  %v238 = vpop.permute.xlu0 %237
  %239 = vrot.lane.b32.xlu0 %v34, 15
  %v240 = vpop.permute.xlu0 %239
  %241 = vrot.lane.b32.xlu0 %v38, 15
  %v242 = vpop.permute.xlu0 %241
  %vm243 = vcmp.lt.s32.totalorder %v80, 15
  %v244 = vsel %vm243, %v228, %v236
  %v245 = vsel %vm243, %v230, %v238
  %v246 = vsel %vm243, %v232, %v240
  %v247 = vsel %vm243, %v234, %v242
  %v248 = vsel %vm243, %v220, %v228
  %v249 = vsel %vm243, %v222, %v230
  %v250 = vsel %vm243, %v224, %v232
  %v251 = vsel %vm243, %v226, %v234
  %v252 = vsel %vm243, %v212, %v220
  %v253 = vsel %vm243, %v214, %v222
  %v254 = vsel %vm243, %v216, %v224
  %v255 = vsel %vm243, %v218, %v226
  %v256 = vsel %vm243, %v236, %v212
  %v257 = vsel %vm243, %v238, %v214
  %v258 = vsel %vm243, %v240, %v216
  %v259 = vsel %vm243, %v242, %v218
  %v260 = vlaneseq
  %v261 = vshrl.u32 %v260, 7
  %v262 = vsub.s32 2, %v261
  %v263 = vrot.slane %v39, %v262
  %v264 = vlaneseq
  %v265 = vshrl.u32 %v264, 7
  %v266 = vsub.s32 2, %v265
  %v267 = vrot.slane %v40, %v266
  %v268 = vlaneseq
  %v269 = vshrl.u32 %v268, 7
  %v270 = vsub.s32 2, %v269
  %v271 = vrot.slane %v41, %v270
  %v272 = vlaneseq
  %v273 = vshrl.u32 %v272, 7
  %v274 = vsub.s32 2, %v273
  %v275 = vrot.slane %v42, %v274
  %v276 = vmul.f32 %v256, %v263
  %v277 = vmul.f32 %v252, %v267
  %v278 = vmul.f32 %v248, %v271
  %v279 = vmul.f32 %v244, %v275
  %v280 = vmul.f32 %v257, %v263
  %v281 = vmul.f32 %v253, %v267
  %v282 = vmul.f32 %v249, %v271
  %v283 = vmul.f32 %v245, %v275
  %v284 = vmul.f32 %v258, %v263
  %v285 = vmul.f32 %v254, %v267
  %v286 = vmul.f32 %v250, %v271
  %v287 = vmul.f32 %v246, %v275
  %v288 = vmul.f32 %v259, %v263
  %v289 = vmul.f32 %v255, %v267
  %v290 = vmul.f32 %v251, %v271
  %v291 = vmul.f32 %v247, %v275
  %292 = vrot.lane.b32.xlu0 %v23, 1
  %v293 = vpop.permute.xlu0 %292
  %294 = vrot.lane.b32.xlu0 %v27, 1
  %v295 = vpop.permute.xlu0 %294
  %296 = vrot.lane.b32.xlu0 %v31, 1
  %v297 = vpop.permute.xlu0 %296
  %298 = vrot.lane.b32.xlu0 %v35, 1
  %v299 = vpop.permute.xlu0 %298
  %300 = vrot.lane.b32.xlu0 %v24, 1
  %v301 = vpop.permute.xlu0 %300
  %302 = vrot.lane.b32.xlu0 %v28, 1
  %v303 = vpop.permute.xlu0 %302
  %304 = vrot.lane.b32.xlu0 %v32, 1
  %v305 = vpop.permute.xlu0 %304
  %306 = vrot.lane.b32.xlu0 %v36, 1
  %v307 = vpop.permute.xlu0 %306
  %308 = vrot.lane.b32.xlu0 %v25, 1
  %v309 = vpop.permute.xlu0 %308
  %310 = vrot.lane.b32.xlu0 %v29, 1
  %v311 = vpop.permute.xlu0 %310
  %312 = vrot.lane.b32.xlu0 %v33, 1
  %v313 = vpop.permute.xlu0 %312
  %314 = vrot.lane.b32.xlu0 %v37, 1
  %v315 = vpop.permute.xlu0 %314
  %316 = vrot.lane.b32.xlu0 %v26, 1
  %v317 = vpop.permute.xlu0 %316
  %318 = vrot.lane.b32.xlu0 %v30, 1
  %v319 = vpop.permute.xlu0 %318
  %320 = vrot.lane.b32.xlu0 %v34, 1
  %v321 = vpop.permute.xlu0 %320
  %322 = vrot.lane.b32.xlu0 %v38, 1
  %v323 = vpop.permute.xlu0 %322
  %vm324 = vcmp.lt.s32.totalorder %v80, 1
  %v325 = vsel %vm324, %v309, %v317
  %v326 = vsel %vm324, %v311, %v319
  %v327 = vsel %vm324, %v313, %v321
  %v328 = vsel %vm324, %v315, %v323
  %v329 = vsel %vm324, %v301, %v309
  %v330 = vsel %vm324, %v303, %v311
  %v331 = vsel %vm324, %v305, %v313
  %v332 = vsel %vm324, %v307, %v315
  %v333 = vsel %vm324, %v293, %v301
  %v334 = vsel %vm324, %v295, %v303
  %v335 = vsel %vm324, %v297, %v305
  %v336 = vsel %vm324, %v299, %v307
  %v337 = vsel %vm324, %v317, %v293
  %v338 = vsel %vm324, %v319, %v295
  %v339 = vsel %vm324, %v321, %v297
  %v340 = vsel %vm324, %v323, %v299
  %v341 = vlaneseq
  %v342 = vshrl.u32 %v341, 7
  %v343 = vsub.s32 3, %v342
  %v344 = vrot.slane %v39, %v343
  %v345 = vlaneseq
  %v346 = vshrl.u32 %v345, 7
  %v347 = vsub.s32 3, %v346
  %v348 = vrot.slane %v40, %v347
  %v349 = vlaneseq
  %v350 = vshrl.u32 %v349, 7
  %v351 = vsub.s32 3, %v350
  %v352 = vrot.slane %v41, %v351
  %v353 = vlaneseq
  %v354 = vshrl.u32 %v353, 7
  %v355 = vsub.s32 3, %v354
  %v356 = vrot.slane %v42, %v355
  %v357 = vmul.f32 %v337, %v344
  %v358 = vmul.f32 %v333, %v348
  %v359 = vmul.f32 %v329, %v352
  %v360 = vmul.f32 %v325, %v356
  %v361 = vmul.f32 %v338, %v344
  %v362 = vmul.f32 %v334, %v348
  %v363 = vmul.f32 %v330, %v352
  %v364 = vmul.f32 %v326, %v356
  %v365 = vmul.f32 %v339, %v344
  %v366 = vmul.f32 %v335, %v348
  %v367 = vmul.f32 %v331, %v352
  %v368 = vmul.f32 %v327, %v356
  %v369 = vmul.f32 %v340, %v344
  %v370 = vmul.f32 %v336, %v348
  %v371 = vmul.f32 %v332, %v352
  %v372 = vmul.f32 %v328, %v356
  %373 = vrot.lane.b32.xlu0 %v23, 127
  %v374 = vpop.permute.xlu0 %373
  %375 = vrot.lane.b32.xlu0 %v27, 127
  %v376 = vpop.permute.xlu0 %375
  %377 = vrot.lane.b32.xlu0 %v31, 127
  %v378 = vpop.permute.xlu0 %377
  %379 = vrot.lane.b32.xlu0 %v35, 127
  %v380 = vpop.permute.xlu0 %379
  %381 = vrot.lane.b32.xlu0 %v24, 127
  %v382 = vpop.permute.xlu0 %381
  %383 = vrot.lane.b32.xlu0 %v28, 127
  %v384 = vpop.permute.xlu0 %383
  %385 = vrot.lane.b32.xlu0 %v32, 127
  %v386 = vpop.permute.xlu0 %385
  %387 = vrot.lane.b32.xlu0 %v36, 127
  %v388 = vpop.permute.xlu0 %387
  %389 = vrot.lane.b32.xlu0 %v25, 127
  %v390 = vpop.permute.xlu0 %389
  %391 = vrot.lane.b32.xlu0 %v29, 127
  %v392 = vpop.permute.xlu0 %391
  %393 = vrot.lane.b32.xlu0 %v33, 127
  %v394 = vpop.permute.xlu0 %393
  %395 = vrot.lane.b32.xlu0 %v37, 127
  %v396 = vpop.permute.xlu0 %395
  %397 = vrot.lane.b32.xlu0 %v26, 127
  %v398 = vpop.permute.xlu0 %397
  %399 = vrot.lane.b32.xlu0 %v30, 127
  %v400 = vpop.permute.xlu0 %399
  %401 = vrot.lane.b32.xlu0 %v34, 127
  %v402 = vpop.permute.xlu0 %401
  %403 = vrot.lane.b32.xlu0 %v38, 127
  %v404 = vpop.permute.xlu0 %403
  %vm405 = vcmp.lt.s32.totalorder %v80, 127
  %v406 = vsel %vm405, %v390, %v398
  %v407 = vsel %vm405, %v392, %v400
  %v408 = vsel %vm405, %v394, %v402
  %v409 = vsel %vm405, %v396, %v404
  %v410 = vsel %vm405, %v382, %v390
  %v411 = vsel %vm405, %v384, %v392
  %v412 = vsel %vm405, %v386, %v394
  %v413 = vsel %vm405, %v388, %v396
  %v414 = vsel %vm405, %v374, %v382
  %v415 = vsel %vm405, %v376, %v384
  %v416 = vsel %vm405, %v378, %v386
  %v417 = vsel %vm405, %v380, %v388
  %v418 = vsel %vm405, %v398, %v374
  %v419 = vsel %vm405, %v400, %v376
  %v420 = vsel %vm405, %v402, %v378
  %v421 = vsel %vm405, %v404, %v380
  %v422 = vlaneseq
  %v423 = vshrl.u32 %v422, 7
  %v424 = vsub.s32 5, %v423
  %v425 = vrot.slane %v39, %v424
  %v426 = vlaneseq
  %v427 = vshrl.u32 %v426, 7
  %v428 = vsub.s32 5, %v427
  %v429 = vrot.slane %v40, %v428
  %v430 = vlaneseq
  %v431 = vshrl.u32 %v430, 7
  %v432 = vsub.s32 5, %v431
  %v433 = vrot.slane %v41, %v432
  %v434 = vlaneseq
  %v435 = vshrl.u32 %v434, 7
  %v436 = vsub.s32 5, %v435
  %v437 = vrot.slane %v42, %v436
  %v438 = vmul.f32 %v414, %v425
  %v439 = vmul.f32 %v410, %v429
  %v440 = vmul.f32 %v406, %v433
  %v441 = vmul.f32 %v418, %v437
  %v442 = vmul.f32 %v415, %v425
  %v443 = vmul.f32 %v411, %v429
  %v444 = vmul.f32 %v407, %v433
  %v445 = vmul.f32 %v419, %v437
  %v446 = vmul.f32 %v416, %v425
  %v447 = vmul.f32 %v412, %v429
  %v448 = vmul.f32 %v408, %v433
  %v449 = vmul.f32 %v420, %v437
  %v450 = vmul.f32 %v417, %v425
  %v451 = vmul.f32 %v413, %v429
  %v452 = vmul.f32 %v409, %v433
  %v453 = vmul.f32 %v421, %v437
  %454 = vrot.lane.b32.xlu0 %v23, 113
  %v455 = vpop.permute.xlu0 %454
  %456 = vrot.lane.b32.xlu0 %v27, 113
  %v457 = vpop.permute.xlu0 %456
  %458 = vrot.lane.b32.xlu0 %v31, 113
  %v459 = vpop.permute.xlu0 %458
  %460 = vrot.lane.b32.xlu0 %v35, 113
  %v461 = vpop.permute.xlu0 %460
  %462 = vrot.lane.b32.xlu0 %v24, 113
  %v463 = vpop.permute.xlu0 %462
  %464 = vrot.lane.b32.xlu0 %v28, 113
  %v465 = vpop.permute.xlu0 %464
  %466 = vrot.lane.b32.xlu0 %v32, 113
  %v467 = vpop.permute.xlu0 %466
  %468 = vrot.lane.b32.xlu0 %v36, 113
  %v469 = vpop.permute.xlu0 %468
  %470 = vrot.lane.b32.xlu0 %v25, 113
  %v471 = vpop.permute.xlu0 %470
  %472 = vrot.lane.b32.xlu0 %v29, 113
  %v473 = vpop.permute.xlu0 %472
  %474 = vrot.lane.b32.xlu0 %v33, 113
  %v475 = vpop.permute.xlu0 %474
  %476 = vrot.lane.b32.xlu0 %v37, 113
  %v477 = vpop.permute.xlu0 %476
  %478 = vrot.lane.b32.xlu0 %v26, 113
  %v479 = vpop.permute.xlu0 %478
  %480 = vrot.lane.b32.xlu0 %v30, 113
  %v481 = vpop.permute.xlu0 %480
  %482 = vrot.lane.b32.xlu0 %v34, 113
  %v483 = vpop.permute.xlu0 %482
  %484 = vrot.lane.b32.xlu0 %v38, 113
  %v485 = vpop.permute.xlu0 %484
  %vm486 = vcmp.lt.s32.totalorder %v80, 113
  %v487 = vsel %vm486, %v471, %v479
  %v488 = vsel %vm486, %v473, %v481
  %v489 = vsel %vm486, %v475, %v483
  %v490 = vsel %vm486, %v477, %v485
  %v491 = vsel %vm486, %v463, %v471
  %v492 = vsel %vm486, %v465, %v473
  %v493 = vsel %vm486, %v467, %v475
  %v494 = vsel %vm486, %v469, %v477
  %v495 = vsel %vm486, %v455, %v463
  %v496 = vsel %vm486, %v457, %v465
  %v497 = vsel %vm486, %v459, %v467
  %v498 = vsel %vm486, %v461, %v469
  %v499 = vsel %vm486, %v479, %v455
  %v500 = vsel %vm486, %v481, %v457
  %v501 = vsel %vm486, %v483, %v459
  %v502 = vsel %vm486, %v485, %v461
  %v503 = vlaneseq
  %v504 = vshrl.u32 %v503, 7
  %v505 = vsub.s32 6, %v504
  %v506 = vrot.slane %v39, %v505
  %v507 = vlaneseq
  %v508 = vshrl.u32 %v507, 7
  %v509 = vsub.s32 6, %v508
  %v510 = vrot.slane %v40, %v509
  %v511 = vlaneseq
  %v512 = vshrl.u32 %v511, 7
  %v513 = vsub.s32 6, %v512
  %v514 = vrot.slane %v41, %v513
  %v515 = vlaneseq
  %v516 = vshrl.u32 %v515, 7
  %v517 = vsub.s32 6, %v516
  %v518 = vrot.slane %v42, %v517
  %v519 = vmul.f32 %v495, %v506
  %v520 = vmul.f32 %v491, %v510
  %v521 = vmul.f32 %v487, %v514
  %v522 = vmul.f32 %v499, %v518
  %v523 = vmul.f32 %v496, %v506
  %v524 = vmul.f32 %v492, %v510
  %v525 = vmul.f32 %v488, %v514
  %v526 = vmul.f32 %v500, %v518
  %v527 = vmul.f32 %v497, %v506
  %v528 = vmul.f32 %v493, %v510
  %v529 = vmul.f32 %v489, %v514
  %v530 = vmul.f32 %v501, %v518
  %v531 = vmul.f32 %v498, %v506
  %v532 = vmul.f32 %v494, %v510
  %v533 = vmul.f32 %v490, %v514
  %v534 = vmul.f32 %v502, %v518
  %535 = vrot.lane.b32.xlu0 %v23, 112
  %v536 = vpop.permute.xlu0 %535
  %537 = vrot.lane.b32.xlu0 %v27, 112
  %v538 = vpop.permute.xlu0 %537
  %539 = vrot.lane.b32.xlu0 %v31, 112
  %v540 = vpop.permute.xlu0 %539
  %541 = vrot.lane.b32.xlu0 %v35, 112
  %v542 = vpop.permute.xlu0 %541
  %543 = vrot.lane.b32.xlu0 %v24, 112
  %v544 = vpop.permute.xlu0 %543
  %545 = vrot.lane.b32.xlu0 %v28, 112
  %v546 = vpop.permute.xlu0 %545
  %547 = vrot.lane.b32.xlu0 %v32, 112
  %v548 = vpop.permute.xlu0 %547
  %549 = vrot.lane.b32.xlu0 %v36, 112
  %v550 = vpop.permute.xlu0 %549
  %551 = vrot.lane.b32.xlu0 %v25, 112
  %v552 = vpop.permute.xlu0 %551
  %553 = vrot.lane.b32.xlu0 %v29, 112
  %v554 = vpop.permute.xlu0 %553
  %555 = vrot.lane.b32.xlu0 %v33, 112
  %v556 = vpop.permute.xlu0 %555
  %557 = vrot.lane.b32.xlu0 %v37, 112
  %v558 = vpop.permute.xlu0 %557
  %559 = vrot.lane.b32.xlu0 %v26, 112
  %v560 = vpop.permute.xlu0 %559
  %561 = vrot.lane.b32.xlu0 %v30, 112
  %v562 = vpop.permute.xlu0 %561
  %563 = vrot.lane.b32.xlu0 %v34, 112
  %v564 = vpop.permute.xlu0 %563
  %565 = vrot.lane.b32.xlu0 %v38, 112
  %v566 = vpop.permute.xlu0 %565
  %vm567 = vcmp.lt.s32.totalorder %v80, 112
  %v568 = vsel %vm567, %v552, %v560
  %v569 = vsel %vm567, %v554, %v562
  %v570 = vsel %vm567, %v556, %v564
  %v571 = vsel %vm567, %v558, %v566
  %v572 = vsel %vm567, %v544, %v552
  %v573 = vsel %vm567, %v546, %v554
  %v574 = vsel %vm567, %v548, %v556
  %v575 = vsel %vm567, %v550, %v558
  %v576 = vsel %vm567, %v536, %v544
  %v577 = vsel %vm567, %v538, %v546
  %v578 = vsel %vm567, %v540, %v548
  %v579 = vsel %vm567, %v542, %v550
  %v580 = vsel %vm567, %v560, %v536
  %v581 = vsel %vm567, %v562, %v538
  %v582 = vsel %vm567, %v564, %v540
  %v583 = vsel %vm567, %v566, %v542
  %v584 = vlaneseq
  %v585 = vshrl.u32 %v584, 7
  %v586 = vsub.s32 7, %v585
  %v587 = vrot.slane %v39, %v586
  %v588 = vlaneseq
  %v589 = vshrl.u32 %v588, 7
  %v590 = vsub.s32 7, %v589
  %v591 = vrot.slane %v40, %v590
  %v592 = vlaneseq
  %v593 = vshrl.u32 %v592, 7
  %v594 = vsub.s32 7, %v593
  %v595 = vrot.slane %v41, %v594
  %v596 = vlaneseq
  %v597 = vshrl.u32 %v596, 7
  %v598 = vsub.s32 7, %v597
  %v599 = vrot.slane %v42, %v598
  %v600 = vmul.f32 %v576, %v587
  %v601 = vmul.f32 %v572, %v591
  %v602 = vmul.f32 %v568, %v595
  %v603 = vmul.f32 %v580, %v599
  %v604 = vmul.f32 %v577, %v587
  %v605 = vmul.f32 %v573, %v591
  %v606 = vmul.f32 %v569, %v595
  %v607 = vmul.f32 %v581, %v599
  %v608 = vmul.f32 %v578, %v587
  %v609 = vmul.f32 %v574, %v591
  %v610 = vmul.f32 %v570, %v595
  %v611 = vmul.f32 %v582, %v599
  %v612 = vmul.f32 %v579, %v587
  %v613 = vmul.f32 %v575, %v591
  %v614 = vmul.f32 %v571, %v595
  %v615 = vmul.f32 %v583, %v599
  %616 = vrot.lane.b32.xlu0 %v23, 111
  %v617 = vpop.permute.xlu0 %616
  %618 = vrot.lane.b32.xlu0 %v27, 111
  %v619 = vpop.permute.xlu0 %618
  %620 = vrot.lane.b32.xlu0 %v31, 111
  %v621 = vpop.permute.xlu0 %620
  %622 = vrot.lane.b32.xlu0 %v35, 111
  %v623 = vpop.permute.xlu0 %622
  %624 = vrot.lane.b32.xlu0 %v24, 111
  %v625 = vpop.permute.xlu0 %624
  %626 = vrot.lane.b32.xlu0 %v28, 111
  %v627 = vpop.permute.xlu0 %626
  %628 = vrot.lane.b32.xlu0 %v32, 111
  %v629 = vpop.permute.xlu0 %628
  %630 = vrot.lane.b32.xlu0 %v36, 111
  %v631 = vpop.permute.xlu0 %630
  %632 = vrot.lane.b32.xlu0 %v25, 111
  %v633 = vpop.permute.xlu0 %632
  %634 = vrot.lane.b32.xlu0 %v29, 111
  %v635 = vpop.permute.xlu0 %634
  %636 = vrot.lane.b32.xlu0 %v33, 111
  %v637 = vpop.permute.xlu0 %636
  %638 = vrot.lane.b32.xlu0 %v37, 111
  %v639 = vpop.permute.xlu0 %638
  %640 = vrot.lane.b32.xlu0 %v26, 111
  %v641 = vpop.permute.xlu0 %640
  %642 = vrot.lane.b32.xlu0 %v30, 111
  %v643 = vpop.permute.xlu0 %642
  %644 = vrot.lane.b32.xlu0 %v34, 111
  %v645 = vpop.permute.xlu0 %644
  %646 = vrot.lane.b32.xlu0 %v38, 111
  %v647 = vpop.permute.xlu0 %646
  %vm648 = vcmp.lt.s32.totalorder %v80, 111
  %v649 = vsel %vm648, %v633, %v641
  %v650 = vsel %vm648, %v635, %v643
  %v651 = vsel %vm648, %v637, %v645
  %v652 = vsel %vm648, %v639, %v647
  %v653 = vsel %vm648, %v625, %v633
  %v654 = vsel %vm648, %v627, %v635
  %v655 = vsel %vm648, %v629, %v637
  %v656 = vsel %vm648, %v631, %v639
  %v657 = vsel %vm648, %v617, %v625
  %v658 = vsel %vm648, %v619, %v627
  %v659 = vsel %vm648, %v621, %v629
  %v660 = vsel %vm648, %v623, %v631
  %v661 = vsel %vm648, %v641, %v617
  %v662 = vsel %vm648, %v643, %v619
  %v663 = vsel %vm648, %v645, %v621
  %v664 = vsel %vm648, %v647, %v623
  %v665 = vlaneseq
  %v666 = vshrl.u32 %v665, 7
  %v667 = vsub.s32 0, %v666
  %v668 = vrot.slane %v43, %v667
  %v669 = vlaneseq
  %v670 = vshrl.u32 %v669, 7
  %v671 = vsub.s32 0, %v670
  %v672 = vrot.slane %v44, %v671
  %v673 = vlaneseq
  %v674 = vshrl.u32 %v673, 7
  %v675 = vsub.s32 0, %v674
  %v676 = vrot.slane %v45, %v675
  %v677 = vlaneseq
  %v678 = vshrl.u32 %v677, 7
  %v679 = vsub.s32 0, %v678
  %v680 = vrot.slane %v46, %v679
  %v681 = vmul.f32 %v657, %v668
  %v682 = vmul.f32 %v653, %v672
  %v683 = vmul.f32 %v649, %v676
  %v684 = vmul.f32 %v661, %v680
  %v685 = vmul.f32 %v658, %v668
  %v686 = vmul.f32 %v654, %v672
  %v687 = vmul.f32 %v650, %v676
  %v688 = vmul.f32 %v662, %v680
  %v689 = vmul.f32 %v659, %v668
  %v690 = vmul.f32 %v655, %v672
  %v691 = vmul.f32 %v651, %v676
  %v692 = vmul.f32 %v663, %v680
  %v693 = vmul.f32 %v660, %v668
  %v694 = vmul.f32 %v656, %v672
  %v695 = vmul.f32 %v652, %v676
  %v696 = vmul.f32 %v664, %v680
  %v697 = vld [vmem:[%s2] sm:$0xff]
  %v698 = vld [vmem:[%s2 + $0x8] sm:$0xff]
  %v699 = vld [vmem:[%s2 + $0x10] sm:$0xff]
  %v700 = vld [vmem:[%s2 + $0x18] sm:$0xff]
  %v701 = vld [vmem:[%s2 + $0x20] sm:$0xff]
  %v702 = vld [vmem:[%s2 + $0x28] sm:$0xff]
  %v703 = vld [vmem:[%s2 + $0x30] sm:$0xff]
  %v704 = vld [vmem:[%s2 + $0x38] sm:$0xff]
  %v705 = vld [vmem:[%s2 + $0x40] sm:$0xff]
  %v706 = vld [vmem:[%s2 + $0x48] sm:$0xff]
  %v707 = vld [vmem:[%s2 + $0x50] sm:$0xff]
  %v708 = vld [vmem:[%s2 + $0x58] sm:$0xff]
  %vm709 = vcmask 261120
  %v711 = vsel %vm709, %v699, 0
  %v714 = vsel %vm709, %v702, 0
  %v717 = vsel %vm709, %v705, 0
  %v720 = vsel %vm709, %v708, 0
  %722 = vmatprep.subr.mxu0 %v115
  %723 = vmatpush1.msra.mxu0 %v114
  %724 = vmatprep.subr.mxu0 %v119
  %725 = vmatpush1.msra.mxu0 %v118
  %726 = vmatprep.subr.mxu0 %v123
  %727 = vmatpush1.msra.mxu0 %v122
  %728 = vmatprep.subr.mxu0 %v127
  %729 = vmatpush1.msra.mxu0 %v126
  %730 = vmatprep.subr.mxu0 %v196
  %731 = vmatpush1.msra.mxu0 %v195
  %732 = vmatprep.subr.mxu0 %v200
  %733 = vmatpush1.msra.mxu0 %v199
  %734 = vmatprep.subr.mxu0 %v204
  %735 = vmatpush1.msra.mxu0 %v203
  %736 = vmatprep.subr.mxu0 %v208
  %737 = vmatpush1.msra.mxu0 %v207
  %738 = vmatprep.subr.mxu0 %v277
  %739 = vmatpush1.msra.mxu0 %v276
  %740 = vmatprep.subr.mxu0 %v281
  %741 = vmatpush1.msra.mxu0 %v280
  %742 = vmatprep.subr.mxu0 %v285
  %743 = vmatpush1.msra.mxu0 %v284
  %744 = vmatprep.subr.mxu0 %v289
  %745 = vmatpush1.msra.mxu0 %v288
  %746 = vmatprep.subr.mxu0 %v358
  %747 = vmatpush1.msra.mxu0 %v357
  %748 = vmatprep.subr.mxu0 %v362
  %749 = vmatpush1.msra.mxu0 %v361
  %750 = vmatprep.subr.mxu0 %v366
  %751 = vmatpush1.msra.mxu0 %v365
  %752 = vmatprep.subr.mxu0 %v370
  %753 = vmatpush1.msra.mxu0 %v369
  %754 = vmatprep.subr.mxu0 %v24
  %755 = vmatpush1.msra.mxu0 %v23
  %756 = vmatprep.subr.mxu0 %v28
  %757 = vmatpush1.msra.mxu0 %v27
  %758 = vmatprep.subr.mxu0 %v32
  %759 = vmatpush1.msra.mxu0 %v31
  %760 = vmatprep.subr.mxu0 %v36
  %761 = vmatpush1.msra.mxu0 %v35
  %762 = vmatprep.subr.mxu0 %v439
  %763 = vmatpush1.msra.mxu0 %v438
  %764 = vmatprep.subr.mxu0 %v443
  %765 = vmatpush1.msra.mxu0 %v442
  %766 = vmatprep.subr.mxu0 %v447
  %767 = vmatpush1.msra.mxu0 %v446
  %768 = vmatprep.subr.mxu0 %v451
  %769 = vmatpush1.msra.mxu0 %v450
  %770 = vmatprep.subr.mxu0 %v520
  %771 = vmatpush1.msra.mxu0 %v519
  %772 = vmatprep.subr.mxu0 %v524
  %773 = vmatpush1.msra.mxu0 %v523
  %774 = vmatprep.subr.mxu0 %v528
  %775 = vmatpush1.msra.mxu0 %v527
  %776 = vmatprep.subr.mxu0 %v532
  %777 = vmatpush1.msra.mxu0 %v531
  %778 = vmatprep.subr.mxu0 %v601
  %779 = vmatpush1.msra.mxu0 %v600
  %780 = vmatprep.subr.mxu0 %v605
  %781 = vmatpush1.msra.mxu0 %v604
  %782 = vmatprep.subr.mxu0 %v609
  %783 = vmatpush1.msra.mxu0 %v608
  %784 = vmatprep.subr.mxu0 %v613
  %785 = vmatpush1.msra.mxu0 %v612
  %786 = vmatprep.mubr.f32.mxu0 %v698
  %787 = vmatmul.mubr.f32.gmra.mrb[0].mxu0 %v697
  %v788 = vpop.f32.mrb[0].mxu0
  %v789 = vadd.f32 0.0, %v788
  %v790 = vpop.f32.mrb[0].mxu0
  %v791 = vadd.f32 0.0, %v790
  %792 = vmatprep.mubr.f32.mxu0 %v701
  %793 = vmatmul.mubr.f32.gmra.mrb[0].mxu0 %v700
  %v794 = vpop.f32.mrb[0].mxu0
  %v795 = vadd.f32 0.0, %v794
  %v796 = vpop.f32.mrb[0].mxu0
  %v797 = vadd.f32 0.0, %v796
  %798 = vmatprep.mubr.f32.mxu0 %v704
  %799 = vmatmul.mubr.f32.gmra.mrb[0].mxu0 %v703
  %v800 = vpop.f32.mrb[0].mxu0
  %v801 = vadd.f32 0.0, %v800
  %v802 = vpop.f32.mrb[0].mxu0
  %v803 = vadd.f32 0.0, %v802
  %804 = vmatprep.mubr.f32.mxu0 %v707
  %805 = vmatmul.mubr.f32.gmra.mrb[0].mxu0 %v706
  %v806 = vpop.f32.mrb[0].mxu0
  %v807 = vadd.f32 0.0, %v806
  %v808 = vpop.f32.mrb[0].mxu0
  %v809 = vadd.f32 0.0, %v808
  %810 = vdwg.mxu0
  %811 = vmatprep.subr.mxu0 %v682
  %812 = vmatpush1.msra.mxu0 %v681
  %813 = vmatprep.subr.mxu0 %v686
  %814 = vmatpush1.msra.mxu0 %v685
  %815 = vmatprep.subr.mxu0 %v690
  %816 = vmatpush1.msra.mxu0 %v689
  %817 = vmatprep.subr.mxu0 %v694
  %818 = vmatpush1.msra.mxu0 %v693
  %819 = vmatprep.subr.mxu0 0.0
  %820 = vmatpush1.msra.mxu0 0.0
  %821 = vmatprep.subr.mxu0 0.0
  %822 = vmatpush1.msra.mxu0 0.0
  %823 = vmatprep.subr.mxu0 0.0
  %824 = vmatpush1.msra.mxu0 0.0
  %825 = vmatprep.subr.mxu0 0.0
  %826 = vmatpush1.msra.mxu0 0.0
  %827 = vmatprep.subr.mxu0 0.0
  %828 = vmatpush1.msra.mxu0 0.0
  %829 = vmatprep.subr.mxu0 0.0
  %830 = vmatpush1.msra.mxu0 0.0
  %831 = vmatprep.subr.mxu0 0.0
  %832 = vmatpush1.msra.mxu0 0.0
  %833 = vmatprep.subr.mxu0 0.0
  %834 = vmatpush1.msra.mxu0 0.0
  %835 = vmatprep.subr.mxu0 0.0
  %836 = vmatpush1.msra.mxu0 0.0
  %837 = vmatprep.subr.mxu0 0.0
  %838 = vmatpush1.msra.mxu0 0.0
  %839 = vmatprep.subr.mxu0 0.0
  %840 = vmatpush1.msra.mxu0 0.0
  %841 = vmatprep.subr.mxu0 0.0
  %842 = vmatpush1.msra.mxu0 0.0
  %843 = vmatprep.subr.mxu0 0.0
  %844 = vmatpush1.msra.mxu0 0.0
  %845 = vmatprep.subr.mxu0 0.0
  %846 = vmatpush1.msra.mxu0 0.0
  %847 = vmatprep.subr.mxu0 0.0
  %848 = vmatpush1.msra.mxu0 0.0
  %849 = vmatprep.subr.mxu0 0.0
  %850 = vmatpush1.msra.mxu0 0.0
  %851 = vmatprep.subr.mxu0 0.0
  %852 = vmatpush1.msra.mxu0 0.0
  %853 = vmatprep.subr.mxu0 0.0
  %854 = vmatpush1.msra.mxu0 0.0
  %855 = vmatprep.subr.mxu0 0.0
  %856 = vmatpush1.msra.mxu0 0.0
  %857 = vmatprep.subr.mxu0 0.0
  %858 = vmatpush1.msra.mxu0 0.0
  %859 = vmatprep.subr.mxu0 0.0
  %860 = vmatpush1.msra.mxu0 0.0
  %861 = vmatprep.subr.mxu0 0.0
  %862 = vmatpush1.msra.mxu0 0.0
  %863 = vmatprep.subr.mxu0 0.0
  %864 = vmatpush1.msra.mxu0 0.0
  %865 = vmatprep.subr.mxu0 0.0
  %866 = vmatpush1.msra.mxu0 0.0
  %867 = vmatprep.subr.mxu0 0.0
  %868 = vmatpush1.msra.mxu0 0.0
  %869 = vmatprep.subr.mxu0 0.0
  %870 = vmatpush1.msra.mxu0 0.0
  %871 = vmatprep.subr.mxu0 0.0
  %872 = vmatpush1.msra.mxu0 0.0
  %873 = vmatprep.subr.mxu0 0.0
  %874 = vmatpush1.msra.mxu0 0.0
  %875 = vmatprep.mubr.f32.mxu0 0.0
  %876 = vmatmul.mubr.f32.gmra.mrb[0].mxu0 %v711
  %v877 = vpop.f32.mrb[0].mxu0
  %v878 = vadd.f32 %v789, %v877
  %v879 = vpop.f32.mrb[0].mxu0
  %v880 = vadd.f32 %v791, %v879
  %881 = vmatprep.mubr.f32.mxu0 0.0
  %882 = vmatmul.mubr.f32.gmra.mrb[0].mxu0 %v714
  %v883 = vpop.f32.mrb[0].mxu0
  %v884 = vadd.f32 %v795, %v883
  %v885 = vpop.f32.mrb[0].mxu0
  %v886 = vadd.f32 %v797, %v885
  %887 = vmatprep.mubr.f32.mxu0 0.0
  %888 = vmatmul.mubr.f32.gmra.mrb[0].mxu0 %v717
  %v889 = vpop.f32.mrb[0].mxu0
  %v890 = vadd.f32 %v801, %v889
  %v891 = vpop.f32.mrb[0].mxu0
  %v892 = vadd.f32 %v803, %v891
  %893 = vmatprep.mubr.f32.mxu0 0.0
  %894 = vmatmul.mubr.f32.gmra.mrb[0].mxu0 %v720
  %v895 = vpop.f32.mrb[0].mxu0
  %v896 = vadd.f32 %v807, %v895
  %v897 = vpop.f32.mrb[0].mxu0
  %v898 = vadd.f32 %v809, %v897
  %899 = vdwg.mxu0
  %900 = vmatprep.subr.mxu0 %v117
  %901 = vmatpush1.msra.mxu0 %v116
  %902 = vmatprep.subr.mxu0 %v121
  %903 = vmatpush1.msra.mxu0 %v120
  %904 = vmatprep.subr.mxu0 %v125
  %905 = vmatpush1.msra.mxu0 %v124
  %906 = vmatprep.subr.mxu0 %v129
  %907 = vmatpush1.msra.mxu0 %v128
  %908 = vmatprep.subr.mxu0 %v198
  %909 = vmatpush1.msra.mxu0 %v197
  %910 = vmatprep.subr.mxu0 %v202
  %911 = vmatpush1.msra.mxu0 %v201
  %912 = vmatprep.subr.mxu0 %v206
  %913 = vmatpush1.msra.mxu0 %v205
  %914 = vmatprep.subr.mxu0 %v210
  %915 = vmatpush1.msra.mxu0 %v209
  %916 = vmatprep.subr.mxu0 %v279
  %917 = vmatpush1.msra.mxu0 %v278
  %918 = vmatprep.subr.mxu0 %v283
  %919 = vmatpush1.msra.mxu0 %v282
  %920 = vmatprep.subr.mxu0 %v287
  %921 = vmatpush1.msra.mxu0 %v286
  %922 = vmatprep.subr.mxu0 %v291
  %923 = vmatpush1.msra.mxu0 %v290
  %924 = vmatprep.subr.mxu0 %v360
  %925 = vmatpush1.msra.mxu0 %v359
  %926 = vmatprep.subr.mxu0 %v364
  %927 = vmatpush1.msra.mxu0 %v363
  %928 = vmatprep.subr.mxu0 %v368
  %929 = vmatpush1.msra.mxu0 %v367
  %930 = vmatprep.subr.mxu0 %v372
  %931 = vmatpush1.msra.mxu0 %v371
  %932 = vmatprep.subr.mxu0 %v26
  %933 = vmatpush1.msra.mxu0 %v25
  %934 = vmatprep.subr.mxu0 %v30
  %935 = vmatpush1.msra.mxu0 %v29
  %936 = vmatprep.subr.mxu0 %v34
  %937 = vmatpush1.msra.mxu0 %v33
  %938 = vmatprep.subr.mxu0 %v38
  %939 = vmatpush1.msra.mxu0 %v37
  %940 = vmatprep.subr.mxu0 %v441
  %941 = vmatpush1.msra.mxu0 %v440
  %942 = vmatprep.subr.mxu0 %v445
  %943 = vmatpush1.msra.mxu0 %v444
  %944 = vmatprep.subr.mxu0 %v449
  %945 = vmatpush1.msra.mxu0 %v448
  %946 = vmatprep.subr.mxu0 %v453
  %947 = vmatpush1.msra.mxu0 %v452
  %948 = vmatprep.subr.mxu0 %v522
  %949 = vmatpush1.msra.mxu0 %v521
  %950 = vmatprep.subr.mxu0 %v526
  %951 = vmatpush1.msra.mxu0 %v525
  %952 = vmatprep.subr.mxu0 %v530
  %953 = vmatpush1.msra.mxu0 %v529
  %954 = vmatprep.subr.mxu0 %v534
  %955 = vmatpush1.msra.mxu0 %v533
  %956 = vmatprep.subr.mxu0 %v603
  %957 = vmatpush1.msra.mxu0 %v602
  %958 = vmatprep.subr.mxu0 %v607
  %959 = vmatpush1.msra.mxu0 %v606
  %960 = vmatprep.subr.mxu0 %v611
  %961 = vmatpush1.msra.mxu0 %v610
  %962 = vmatprep.subr.mxu0 %v615
  %963 = vmatpush1.msra.mxu0 %v614
  %964 = vmatprep.mubr.f32.mxu0 %v698
  %965 = vmatmul.mubr.f32.gmra.mrb[0].mxu0 %v697
  %v966 = vpop.f32.mrb[0].mxu0
  %v967 = vadd.f32 0.0, %v966
  %v968 = vpop.f32.mrb[0].mxu0
  %v969 = vadd.f32 0.0, %v968
  %970 = vmatprep.mubr.f32.mxu0 %v701
  %971 = vmatmul.mubr.f32.gmra.mrb[0].mxu0 %v700
  %v972 = vpop.f32.mrb[0].mxu0
  %v973 = vadd.f32 0.0, %v972
  %v974 = vpop.f32.mrb[0].mxu0
  %v975 = vadd.f32 0.0, %v974
  %976 = vmatprep.mubr.f32.mxu0 %v704
  %977 = vmatmul.mubr.f32.gmra.mrb[0].mxu0 %v703
  %v978 = vpop.f32.mrb[0].mxu0
  %v979 = vadd.f32 0.0, %v978
  %v980 = vpop.f32.mrb[0].mxu0
  %v981 = vadd.f32 0.0, %v980
  %982 = vmatprep.mubr.f32.mxu0 %v707
  %983 = vmatmul.mubr.f32.gmra.mrb[0].mxu0 %v706
  %v984 = vpop.f32.mrb[0].mxu0
  %v985 = vadd.f32 0.0, %v984
  %v986 = vpop.f32.mrb[0].mxu0
  %v987 = vadd.f32 0.0, %v986
  %988 = vdwg.mxu0
  %989 = vmatprep.subr.mxu0 %v684
  %990 = vmatpush1.msra.mxu0 %v683
  %991 = vmatprep.subr.mxu0 %v688
  %992 = vmatpush1.msra.mxu0 %v687
  %993 = vmatprep.subr.mxu0 %v692
  %994 = vmatpush1.msra.mxu0 %v691
  %995 = vmatprep.subr.mxu0 %v696
  %996 = vmatpush1.msra.mxu0 %v695
  %997 = vmatprep.subr.mxu0 0.0
  %998 = vmatpush1.msra.mxu0 0.0
  %999 = vmatprep.subr.mxu0 0.0
  %1000 = vmatpush1.msra.mxu0 0.0
  %1001 = vmatprep.subr.mxu0 0.0
  %1002 = vmatpush1.msra.mxu0 0.0
  %1003 = vmatprep.subr.mxu0 0.0
  %1004 = vmatpush1.msra.mxu0 0.0
  %1005 = vmatprep.subr.mxu0 0.0
  %1006 = vmatpush1.msra.mxu0 0.0
  %1007 = vmatprep.subr.mxu0 0.0
  %1008 = vmatpush1.msra.mxu0 0.0
  %1009 = vmatprep.subr.mxu0 0.0
  %1010 = vmatpush1.msra.mxu0 0.0
  %1011 = vmatprep.subr.mxu0 0.0
  %1012 = vmatpush1.msra.mxu0 0.0
  %1013 = vmatprep.subr.mxu0 0.0
  %1014 = vmatpush1.msra.mxu0 0.0
  %1015 = vmatprep.subr.mxu0 0.0
  %1016 = vmatpush1.msra.mxu0 0.0
  %1017 = vmatprep.subr.mxu0 0.0
  %1018 = vmatpush1.msra.mxu0 0.0
  %1019 = vmatprep.subr.mxu0 0.0
  %1020 = vmatpush1.msra.mxu0 0.0
  %1021 = vmatprep.subr.mxu0 0.0
  %1022 = vmatpush1.msra.mxu0 0.0
  %1023 = vmatprep.subr.mxu0 0.0
  %1024 = vmatpush1.msra.mxu0 0.0
  %1025 = vmatprep.subr.mxu0 0.0
  %1026 = vmatpush1.msra.mxu0 0.0
  %1027 = vmatprep.subr.mxu0 0.0
  %1028 = vmatpush1.msra.mxu0 0.0
  %1029 = vmatprep.subr.mxu0 0.0
  %1030 = vmatpush1.msra.mxu0 0.0
  %1031 = vmatprep.subr.mxu0 0.0
  %1032 = vmatpush1.msra.mxu0 0.0
  %1033 = vmatprep.subr.mxu0 0.0
  %1034 = vmatpush1.msra.mxu0 0.0
  %1035 = vmatprep.subr.mxu0 0.0
  %1036 = vmatpush1.msra.mxu0 0.0
  %1037 = vmatprep.subr.mxu0 0.0
  %1038 = vmatpush1.msra.mxu0 0.0
  %1039 = vmatprep.subr.mxu0 0.0
  %1040 = vmatpush1.msra.mxu0 0.0
  %1041 = vmatprep.subr.mxu0 0.0
  %1042 = vmatpush1.msra.mxu0 0.0
  %1043 = vmatprep.subr.mxu0 0.0
  %1044 = vmatpush1.msra.mxu0 0.0
  %1045 = vmatprep.subr.mxu0 0.0
  %1046 = vmatpush1.msra.mxu0 0.0
  %1047 = vmatprep.subr.mxu0 0.0
  %1048 = vmatpush1.msra.mxu0 0.0
  %1049 = vmatprep.subr.mxu0 0.0
  %1050 = vmatpush1.msra.mxu0 0.0
  %1051 = vmatprep.subr.mxu0 0.0
  %1052 = vmatpush1.msra.mxu0 0.0
  %1053 = vmatprep.mubr.f32.mxu0 0.0
  %1054 = vmatmul.mubr.f32.gmra.mrb[0].mxu0 %v711
  %v1055 = vpop.f32.mrb[0].mxu0
  %v1056 = vadd.f32 %v967, %v1055
  %v1057 = vpop.f32.mrb[0].mxu0
  %v1058 = vadd.f32 %v969, %v1057
  %1059 = vmatprep.mubr.f32.mxu0 0.0
  %1060 = vmatmul.mubr.f32.gmra.mrb[0].mxu0 %v714
  %v1061 = vpop.f32.mrb[0].mxu0
  %v1062 = vadd.f32 %v973, %v1061
  %v1063 = vpop.f32.mrb[0].mxu0
  %v1064 = vadd.f32 %v975, %v1063
  %1065 = vmatprep.mubr.f32.mxu0 0.0
  %1066 = vmatmul.mubr.f32.gmra.mrb[0].mxu0 %v717
  %v1067 = vpop.f32.mrb[0].mxu0
  %v1068 = vadd.f32 %v979, %v1067
  %v1069 = vpop.f32.mrb[0].mxu0
  %v1070 = vadd.f32 %v981, %v1069
  %1071 = vmatprep.mubr.f32.mxu0 0.0
  %1072 = vmatmul.mubr.f32.gmra.mrb[0].mxu0 %v720
  %v1073 = vpop.f32.mrb[0].mxu0
  %v1074 = vadd.f32 %v985, %v1073
  %v1075 = vpop.f32.mrb[0].mxu0
  %v1076 = vadd.f32 %v987, %v1075
  %1077 = vdwg.mxu0
  %v1078 = vmax.f32 %v878, 0.0
  %v1079 = vmax.f32 %v880, 0.0
  %v1080 = vmax.f32 %v1056, 0.0
  %v1081 = vmax.f32 %v1058, 0.0
  %v1082 = vmax.f32 %v884, 0.0
  %v1083 = vmax.f32 %v886, 0.0
  %v1084 = vmax.f32 %v1062, 0.0
  %v1085 = vmax.f32 %v1064, 0.0
  %v1086 = vmax.f32 %v890, 0.0
  %v1087 = vmax.f32 %v892, 0.0
  %v1088 = vmax.f32 %v1068, 0.0
  %v1089 = vmax.f32 %v1070, 0.0
  %v1090 = vmax.f32 %v896, 0.0
  %v1091 = vmax.f32 %v898, 0.0
  %v1092 = vmax.f32 %v1074, 0.0
  %v1093 = vmax.f32 %v1076, 0.0
  %1094 = vrot.lane.b32.xlu0 %v1078, 17
  %v1095 = vpop.permute.xlu0 %1094
  %1096 = vrot.lane.b32.xlu0 %v1082, 17
  %v1097 = vpop.permute.xlu0 %1096
  %1098 = vrot.lane.b32.xlu0 %v1086, 17
  %v1099 = vpop.permute.xlu0 %1098
  %1100 = vrot.lane.b32.xlu0 %v1090, 17
  %v1101 = vpop.permute.xlu0 %1100
  %1102 = vrot.lane.b32.xlu0 %v1079, 17
  %v1103 = vpop.permute.xlu0 %1102
  %1104 = vrot.lane.b32.xlu0 %v1083, 17
  %v1105 = vpop.permute.xlu0 %1104
  %1106 = vrot.lane.b32.xlu0 %v1087, 17
  %v1107 = vpop.permute.xlu0 %1106
  %1108 = vrot.lane.b32.xlu0 %v1091, 17
  %v1109 = vpop.permute.xlu0 %1108
  %1110 = vrot.lane.b32.xlu0 %v1080, 17
  %v1111 = vpop.permute.xlu0 %1110
  %1112 = vrot.lane.b32.xlu0 %v1084, 17
  %v1113 = vpop.permute.xlu0 %1112
  %1114 = vrot.lane.b32.xlu0 %v1088, 17
  %v1115 = vpop.permute.xlu0 %1114
  %1116 = vrot.lane.b32.xlu0 %v1092, 17
  %v1117 = vpop.permute.xlu0 %1116
  %1118 = vrot.lane.b32.xlu0 %v1081, 17
  %v1119 = vpop.permute.xlu0 %1118
  %1120 = vrot.lane.b32.xlu0 %v1085, 17
  %v1121 = vpop.permute.xlu0 %1120
  %1122 = vrot.lane.b32.xlu0 %v1089, 17
  %v1123 = vpop.permute.xlu0 %1122
  %1124 = vrot.lane.b32.xlu0 %v1093, 17
  %v1125 = vpop.permute.xlu0 %1124
  %v1126 = vsel %vm81, %v1111, %v1119
  %v1127 = vsel %vm81, %v1113, %v1121
  %v1128 = vsel %vm81, %v1115, %v1123
  %v1129 = vsel %vm81, %v1117, %v1125
  %v1130 = vsel %vm81, %v1103, %v1111
  %v1131 = vsel %vm81, %v1105, %v1113
  %v1132 = vsel %vm81, %v1107, %v1115
  %v1133 = vsel %vm81, %v1109, %v1117
  %v1134 = vsel %vm81, %v1095, %v1103
  %v1135 = vsel %vm81, %v1097, %v1105
  %v1136 = vsel %vm81, %v1099, %v1107
  %v1137 = vsel %vm81, %v1101, %v1109
  %v1138 = vsel %vm81, %v1119, %v1095
  %v1139 = vsel %vm81, %v1121, %v1097
  %v1140 = vsel %vm81, %v1123, %v1099
  %v1141 = vsel %vm81, %v1125, %v1101
  %v1142 = vmul.f32 %v1138, %v101
  %v1143 = vmul.f32 %v1134, %v105
  %v1144 = vmul.f32 %v1130, %v109
  %v1145 = vmul.f32 %v1126, %v113
  %v1146 = vmul.f32 %v1139, %v101
  %v1147 = vmul.f32 %v1135, %v105
  %v1148 = vmul.f32 %v1131, %v109
  %v1149 = vmul.f32 %v1127, %v113
  %v1150 = vmul.f32 %v1140, %v101
  %v1151 = vmul.f32 %v1136, %v105
  %v1152 = vmul.f32 %v1132, %v109
  %v1153 = vmul.f32 %v1128, %v113
  %v1154 = vmul.f32 %v1141, %v101
  %v1155 = vmul.f32 %v1137, %v105
  %v1156 = vmul.f32 %v1133, %v109
  %v1157 = vmul.f32 %v1129, %v113
  %1158 = vrot.lane.b32.xlu0 %v1078, 16
  %v1159 = vpop.permute.xlu0 %1158
  %1160 = vrot.lane.b32.xlu0 %v1082, 16
  %v1161 = vpop.permute.xlu0 %1160
  %1162 = vrot.lane.b32.xlu0 %v1086, 16
  %v1163 = vpop.permute.xlu0 %1162
  %1164 = vrot.lane.b32.xlu0 %v1090, 16
  %v1165 = vpop.permute.xlu0 %1164
  %1166 = vrot.lane.b32.xlu0 %v1079, 16
  %v1167 = vpop.permute.xlu0 %1166
  %1168 = vrot.lane.b32.xlu0 %v1083, 16
  %v1169 = vpop.permute.xlu0 %1168
  %1170 = vrot.lane.b32.xlu0 %v1087, 16
  %v1171 = vpop.permute.xlu0 %1170
  %1172 = vrot.lane.b32.xlu0 %v1091, 16
  %v1173 = vpop.permute.xlu0 %1172
  %1174 = vrot.lane.b32.xlu0 %v1080, 16
  %v1175 = vpop.permute.xlu0 %1174
  %1176 = vrot.lane.b32.xlu0 %v1084, 16
  %v1177 = vpop.permute.xlu0 %1176
  %1178 = vrot.lane.b32.xlu0 %v1088, 16
  %v1179 = vpop.permute.xlu0 %1178
  %1180 = vrot.lane.b32.xlu0 %v1092, 16
  %v1181 = vpop.permute.xlu0 %1180
  %1182 = vrot.lane.b32.xlu0 %v1081, 16
  %v1183 = vpop.permute.xlu0 %1182
  %1184 = vrot.lane.b32.xlu0 %v1085, 16
  %v1185 = vpop.permute.xlu0 %1184
  %1186 = vrot.lane.b32.xlu0 %v1089, 16
  %v1187 = vpop.permute.xlu0 %1186
  %1188 = vrot.lane.b32.xlu0 %v1093, 16
  %v1189 = vpop.permute.xlu0 %1188
  %v1190 = vsel %vm162, %v1175, %v1183
  %v1191 = vsel %vm162, %v1177, %v1185
  %v1192 = vsel %vm162, %v1179, %v1187
  %v1193 = vsel %vm162, %v1181, %v1189
  %v1194 = vsel %vm162, %v1167, %v1175
  %v1195 = vsel %vm162, %v1169, %v1177
  %v1196 = vsel %vm162, %v1171, %v1179
  %v1197 = vsel %vm162, %v1173, %v1181
  %v1198 = vsel %vm162, %v1159, %v1167
  %v1199 = vsel %vm162, %v1161, %v1169
  %v1200 = vsel %vm162, %v1163, %v1171
  %v1201 = vsel %vm162, %v1165, %v1173
  %v1202 = vsel %vm162, %v1183, %v1159
  %v1203 = vsel %vm162, %v1185, %v1161
  %v1204 = vsel %vm162, %v1187, %v1163
  %v1205 = vsel %vm162, %v1189, %v1165
  %v1206 = vmul.f32 %v1202, %v182
  %v1207 = vmul.f32 %v1198, %v186
  %v1208 = vmul.f32 %v1194, %v190
  %v1209 = vmul.f32 %v1190, %v194
  %v1210 = vmul.f32 %v1203, %v182
  %v1211 = vmul.f32 %v1199, %v186
  %v1212 = vmul.f32 %v1195, %v190
  %v1213 = vmul.f32 %v1191, %v194
  %v1214 = vmul.f32 %v1204, %v182
  %v1215 = vmul.f32 %v1200, %v186
  %v1216 = vmul.f32 %v1196, %v190
  %v1217 = vmul.f32 %v1192, %v194
  %v1218 = vmul.f32 %v1205, %v182
  %v1219 = vmul.f32 %v1201, %v186
  %v1220 = vmul.f32 %v1197, %v190
  %v1221 = vmul.f32 %v1193, %v194
  %1222 = vrot.lane.b32.xlu0 %v1078, 15
  %v1223 = vpop.permute.xlu0 %1222
  %1224 = vrot.lane.b32.xlu0 %v1082, 15
  %v1225 = vpop.permute.xlu0 %1224
  %1226 = vrot.lane.b32.xlu0 %v1086, 15
  %v1227 = vpop.permute.xlu0 %1226
  %1228 = vrot.lane.b32.xlu0 %v1090, 15
  %v1229 = vpop.permute.xlu0 %1228
  %1230 = vrot.lane.b32.xlu0 %v1079, 15
  %v1231 = vpop.permute.xlu0 %1230
  %1232 = vrot.lane.b32.xlu0 %v1083, 15
  %v1233 = vpop.permute.xlu0 %1232
  %1234 = vrot.lane.b32.xlu0 %v1087, 15
  %v1235 = vpop.permute.xlu0 %1234
  %1236 = vrot.lane.b32.xlu0 %v1091, 15
  %v1237 = vpop.permute.xlu0 %1236
  %1238 = vrot.lane.b32.xlu0 %v1080, 15
  %v1239 = vpop.permute.xlu0 %1238
  %1240 = vrot.lane.b32.xlu0 %v1084, 15
  %v1241 = vpop.permute.xlu0 %1240
  %1242 = vrot.lane.b32.xlu0 %v1088, 15
  %v1243 = vpop.permute.xlu0 %1242
  %1244 = vrot.lane.b32.xlu0 %v1092, 15
  %v1245 = vpop.permute.xlu0 %1244
  %1246 = vrot.lane.b32.xlu0 %v1081, 15
  %v1247 = vpop.permute.xlu0 %1246
  %1248 = vrot.lane.b32.xlu0 %v1085, 15
  %v1249 = vpop.permute.xlu0 %1248
  %1250 = vrot.lane.b32.xlu0 %v1089, 15
  %v1251 = vpop.permute.xlu0 %1250
  %1252 = vrot.lane.b32.xlu0 %v1093, 15
  %v1253 = vpop.permute.xlu0 %1252
  %v1254 = vsel %vm243, %v1239, %v1247
  %v1255 = vsel %vm243, %v1241, %v1249
  %v1256 = vsel %vm243, %v1243, %v1251
  %v1257 = vsel %vm243, %v1245, %v1253
  %v1258 = vsel %vm243, %v1231, %v1239
  %v1259 = vsel %vm243, %v1233, %v1241
  %v1260 = vsel %vm243, %v1235, %v1243
  %v1261 = vsel %vm243, %v1237, %v1245
  %v1262 = vsel %vm243, %v1223, %v1231
  %v1263 = vsel %vm243, %v1225, %v1233
  %v1264 = vsel %vm243, %v1227, %v1235
  %v1265 = vsel %vm243, %v1229, %v1237
  %v1266 = vsel %vm243, %v1247, %v1223
  %v1267 = vsel %vm243, %v1249, %v1225
  %v1268 = vsel %vm243, %v1251, %v1227
  %v1269 = vsel %vm243, %v1253, %v1229
  %v1270 = vmul.f32 %v1266, %v263
  %v1271 = vmul.f32 %v1262, %v267
  %v1272 = vmul.f32 %v1258, %v271
  %v1273 = vmul.f32 %v1254, %v275
  %v1274 = vmul.f32 %v1267, %v263
  %v1275 = vmul.f32 %v1263, %v267
  %v1276 = vmul.f32 %v1259, %v271
  %v1277 = vmul.f32 %v1255, %v275
  %v1278 = vmul.f32 %v1268, %v263
  %v1279 = vmul.f32 %v1264, %v267
  %v1280 = vmul.f32 %v1260, %v271
  %v1281 = vmul.f32 %v1256, %v275
  %v1282 = vmul.f32 %v1269, %v263
  %v1283 = vmul.f32 %v1265, %v267
  %v1284 = vmul.f32 %v1261, %v271
  %v1285 = vmul.f32 %v1257, %v275
  %1286 = vrot.lane.b32.xlu0 %v1078, 1
  %v1287 = vpop.permute.xlu0 %1286
  %1288 = vrot.lane.b32.xlu0 %v1082, 1
  %v1289 = vpop.permute.xlu0 %1288
  %1290 = vrot.lane.b32.xlu0 %v1086, 1
  %v1291 = vpop.permute.xlu0 %1290
  %1292 = vrot.lane.b32.xlu0 %v1090, 1
  %v1293 = vpop.permute.xlu0 %1292
  %1294 = vrot.lane.b32.xlu0 %v1079, 1
  %v1295 = vpop.permute.xlu0 %1294
  %1296 = vrot.lane.b32.xlu0 %v1083, 1
  %v1297 = vpop.permute.xlu0 %1296
  %1298 = vrot.lane.b32.xlu0 %v1087, 1
  %v1299 = vpop.permute.xlu0 %1298
  %1300 = vrot.lane.b32.xlu0 %v1091, 1
  %v1301 = vpop.permute.xlu0 %1300
  %1302 = vrot.lane.b32.xlu0 %v1080, 1
  %v1303 = vpop.permute.xlu0 %1302
  %1304 = vrot.lane.b32.xlu0 %v1084, 1
  %v1305 = vpop.permute.xlu0 %1304
  %1306 = vrot.lane.b32.xlu0 %v1088, 1
  %v1307 = vpop.permute.xlu0 %1306
  %1308 = vrot.lane.b32.xlu0 %v1092, 1
  %v1309 = vpop.permute.xlu0 %1308
  %1310 = vrot.lane.b32.xlu0 %v1081, 1
  %v1311 = vpop.permute.xlu0 %1310
  %1312 = vrot.lane.b32.xlu0 %v1085, 1
  %v1313 = vpop.permute.xlu0 %1312
  %1314 = vrot.lane.b32.xlu0 %v1089, 1
  %v1315 = vpop.permute.xlu0 %1314
  %1316 = vrot.lane.b32.xlu0 %v1093, 1
  %v1317 = vpop.permute.xlu0 %1316
  %v1318 = vsel %vm324, %v1303, %v1311
  %v1319 = vsel %vm324, %v1305, %v1313
  %v1320 = vsel %vm324, %v1307, %v1315
  %v1321 = vsel %vm324, %v1309, %v1317
  %v1322 = vsel %vm324, %v1295, %v1303
  %v1323 = vsel %vm324, %v1297, %v1305
  %v1324 = vsel %vm324, %v1299, %v1307
  %v1325 = vsel %vm324, %v1301, %v1309
  %v1326 = vsel %vm324, %v1287, %v1295
  %v1327 = vsel %vm324, %v1289, %v1297
  %v1328 = vsel %vm324, %v1291, %v1299
  %v1329 = vsel %vm324, %v1293, %v1301
  %v1330 = vsel %vm324, %v1311, %v1287
  %v1331 = vsel %vm324, %v1313, %v1289
  %v1332 = vsel %vm324, %v1315, %v1291
  %v1333 = vsel %vm324, %v1317, %v1293
  %v1334 = vmul.f32 %v1330, %v344
  %v1335 = vmul.f32 %v1326, %v348
  %v1336 = vmul.f32 %v1322, %v352
  %v1337 = vmul.f32 %v1318, %v356
  %v1338 = vmul.f32 %v1331, %v344
  %v1339 = vmul.f32 %v1327, %v348
  %v1340 = vmul.f32 %v1323, %v352
  %v1341 = vmul.f32 %v1319, %v356
  %v1342 = vmul.f32 %v1332, %v344
  %v1343 = vmul.f32 %v1328, %v348
  %v1344 = vmul.f32 %v1324, %v352
  %v1345 = vmul.f32 %v1320, %v356
  %v1346 = vmul.f32 %v1333, %v344
  %v1347 = vmul.f32 %v1329, %v348
  %v1348 = vmul.f32 %v1325, %v352
  %v1349 = vmul.f32 %v1321, %v356
  %1350 = vrot.lane.b32.xlu0 %v1078, 127
  %v1351 = vpop.permute.xlu0 %1350
  %1352 = vrot.lane.b32.xlu0 %v1082, 127
  %v1353 = vpop.permute.xlu0 %1352
  %1354 = vrot.lane.b32.xlu0 %v1086, 127
  %v1355 = vpop.permute.xlu0 %1354
  %1356 = vrot.lane.b32.xlu0 %v1090, 127
  %v1357 = vpop.permute.xlu0 %1356
  %1358 = vrot.lane.b32.xlu0 %v1079, 127
  %v1359 = vpop.permute.xlu0 %1358
  %1360 = vrot.lane.b32.xlu0 %v1083, 127
  %v1361 = vpop.permute.xlu0 %1360
  %1362 = vrot.lane.b32.xlu0 %v1087, 127
  %v1363 = vpop.permute.xlu0 %1362
  %1364 = vrot.lane.b32.xlu0 %v1091, 127
  %v1365 = vpop.permute.xlu0 %1364
  %1366 = vrot.lane.b32.xlu0 %v1080, 127
  %v1367 = vpop.permute.xlu0 %1366
  %1368 = vrot.lane.b32.xlu0 %v1084, 127
  %v1369 = vpop.permute.xlu0 %1368
  %1370 = vrot.lane.b32.xlu0 %v1088, 127
  %v1371 = vpop.permute.xlu0 %1370
  %1372 = vrot.lane.b32.xlu0 %v1092, 127
  %v1373 = vpop.permute.xlu0 %1372
  %1374 = vrot.lane.b32.xlu0 %v1081, 127
  %v1375 = vpop.permute.xlu0 %1374
  %1376 = vrot.lane.b32.xlu0 %v1085, 127
  %v1377 = vpop.permute.xlu0 %1376
  %1378 = vrot.lane.b32.xlu0 %v1089, 127
  %v1379 = vpop.permute.xlu0 %1378
  %1380 = vrot.lane.b32.xlu0 %v1093, 127
  %v1381 = vpop.permute.xlu0 %1380
  %v1382 = vsel %vm405, %v1367, %v1375
  %v1383 = vsel %vm405, %v1369, %v1377
  %v1384 = vsel %vm405, %v1371, %v1379
  %v1385 = vsel %vm405, %v1373, %v1381
  %v1386 = vsel %vm405, %v1359, %v1367
  %v1387 = vsel %vm405, %v1361, %v1369
  %v1388 = vsel %vm405, %v1363, %v1371
  %v1389 = vsel %vm405, %v1365, %v1373
  %v1390 = vsel %vm405, %v1351, %v1359
  %v1391 = vsel %vm405, %v1353, %v1361
  %v1392 = vsel %vm405, %v1355, %v1363
  %v1393 = vsel %vm405, %v1357, %v1365
  %v1394 = vsel %vm405, %v1375, %v1351
  %v1395 = vsel %vm405, %v1377, %v1353
  %v1396 = vsel %vm405, %v1379, %v1355
  %v1397 = vsel %vm405, %v1381, %v1357
  %v1398 = vmul.f32 %v1390, %v425
  %v1399 = vmul.f32 %v1386, %v429
  %v1400 = vmul.f32 %v1382, %v433
  %v1401 = vmul.f32 %v1394, %v437
  %v1402 = vmul.f32 %v1391, %v425
  %v1403 = vmul.f32 %v1387, %v429
  %v1404 = vmul.f32 %v1383, %v433
  %v1405 = vmul.f32 %v1395, %v437
  %v1406 = vmul.f32 %v1392, %v425
  %v1407 = vmul.f32 %v1388, %v429
  %v1408 = vmul.f32 %v1384, %v433
  %v1409 = vmul.f32 %v1396, %v437
  %v1410 = vmul.f32 %v1393, %v425
  %v1411 = vmul.f32 %v1389, %v429
  %v1412 = vmul.f32 %v1385, %v433
  %v1413 = vmul.f32 %v1397, %v437
  %1414 = vrot.lane.b32.xlu0 %v1078, 113
  %v1415 = vpop.permute.xlu0 %1414
  %1416 = vrot.lane.b32.xlu0 %v1082, 113
  %v1417 = vpop.permute.xlu0 %1416
  %1418 = vrot.lane.b32.xlu0 %v1086, 113
  %v1419 = vpop.permute.xlu0 %1418
  %1420 = vrot.lane.b32.xlu0 %v1090, 113
  %v1421 = vpop.permute.xlu0 %1420
  %1422 = vrot.lane.b32.xlu0 %v1079, 113
  %v1423 = vpop.permute.xlu0 %1422
  %1424 = vrot.lane.b32.xlu0 %v1083, 113
  %v1425 = vpop.permute.xlu0 %1424
  %1426 = vrot.lane.b32.xlu0 %v1087, 113
  %v1427 = vpop.permute.xlu0 %1426
  %1428 = vrot.lane.b32.xlu0 %v1091, 113
  %v1429 = vpop.permute.xlu0 %1428
  %1430 = vrot.lane.b32.xlu0 %v1080, 113
  %v1431 = vpop.permute.xlu0 %1430
  %1432 = vrot.lane.b32.xlu0 %v1084, 113
  %v1433 = vpop.permute.xlu0 %1432
  %1434 = vrot.lane.b32.xlu0 %v1088, 113
  %v1435 = vpop.permute.xlu0 %1434
  %1436 = vrot.lane.b32.xlu0 %v1092, 113
  %v1437 = vpop.permute.xlu0 %1436
  %1438 = vrot.lane.b32.xlu0 %v1081, 113
  %v1439 = vpop.permute.xlu0 %1438
  %1440 = vrot.lane.b32.xlu0 %v1085, 113
  %v1441 = vpop.permute.xlu0 %1440
  %1442 = vrot.lane.b32.xlu0 %v1089, 113
  %v1443 = vpop.permute.xlu0 %1442
  %1444 = vrot.lane.b32.xlu0 %v1093, 113
  %v1445 = vpop.permute.xlu0 %1444
  %v1446 = vsel %vm486, %v1431, %v1439
  %v1447 = vsel %vm486, %v1433, %v1441
  %v1448 = vsel %vm486, %v1435, %v1443
  %v1449 = vsel %vm486, %v1437, %v1445
  %v1450 = vsel %vm486, %v1423, %v1431
  %v1451 = vsel %vm486, %v1425, %v1433
  %v1452 = vsel %vm486, %v1427, %v1435
  %v1453 = vsel %vm486, %v1429, %v1437
  %v1454 = vsel %vm486, %v1415, %v1423
  %v1455 = vsel %vm486, %v1417, %v1425
  %v1456 = vsel %vm486, %v1419, %v1427
  %v1457 = vsel %vm486, %v1421, %v1429
  %v1458 = vsel %vm486, %v1439, %v1415
  %v1459 = vsel %vm486, %v1441, %v1417
  %v1460 = vsel %vm486, %v1443, %v1419
  %v1461 = vsel %vm486, %v1445, %v1421
  %v1462 = vmul.f32 %v1454, %v506
  %v1463 = vmul.f32 %v1450, %v510
  %v1464 = vmul.f32 %v1446, %v514
  %v1465 = vmul.f32 %v1458, %v518
  %v1466 = vmul.f32 %v1455, %v506
  %v1467 = vmul.f32 %v1451, %v510
  %v1468 = vmul.f32 %v1447, %v514
  %v1469 = vmul.f32 %v1459, %v518
  %v1470 = vmul.f32 %v1456, %v506
  %v1471 = vmul.f32 %v1452, %v510
  %v1472 = vmul.f32 %v1448, %v514
  %v1473 = vmul.f32 %v1460, %v518
  %v1474 = vmul.f32 %v1457, %v506
  %v1475 = vmul.f32 %v1453, %v510
  %v1476 = vmul.f32 %v1449, %v514
  %v1477 = vmul.f32 %v1461, %v518
  %1478 = vrot.lane.b32.xlu0 %v1078, 112
  %v1479 = vpop.permute.xlu0 %1478
  %1480 = vrot.lane.b32.xlu0 %v1082, 112
  %v1481 = vpop.permute.xlu0 %1480
  %1482 = vrot.lane.b32.xlu0 %v1086, 112
  %v1483 = vpop.permute.xlu0 %1482
  %1484 = vrot.lane.b32.xlu0 %v1090, 112
  %v1485 = vpop.permute.xlu0 %1484
  %1486 = vrot.lane.b32.xlu0 %v1079, 112
  %v1487 = vpop.permute.xlu0 %1486
  %1488 = vrot.lane.b32.xlu0 %v1083, 112
  %v1489 = vpop.permute.xlu0 %1488
  %1490 = vrot.lane.b32.xlu0 %v1087, 112
  %v1491 = vpop.permute.xlu0 %1490
  %1492 = vrot.lane.b32.xlu0 %v1091, 112
  %v1493 = vpop.permute.xlu0 %1492
  %1494 = vrot.lane.b32.xlu0 %v1080, 112
  %v1495 = vpop.permute.xlu0 %1494
  %1496 = vrot.lane.b32.xlu0 %v1084, 112
  %v1497 = vpop.permute.xlu0 %1496
  %1498 = vrot.lane.b32.xlu0 %v1088, 112
  %v1499 = vpop.permute.xlu0 %1498
  %1500 = vrot.lane.b32.xlu0 %v1092, 112
  %v1501 = vpop.permute.xlu0 %1500
  %1502 = vrot.lane.b32.xlu0 %v1081, 112
  %v1503 = vpop.permute.xlu0 %1502
  %1504 = vrot.lane.b32.xlu0 %v1085, 112
  %v1505 = vpop.permute.xlu0 %1504
  %1506 = vrot.lane.b32.xlu0 %v1089, 112
  %v1507 = vpop.permute.xlu0 %1506
  %1508 = vrot.lane.b32.xlu0 %v1093, 112
  %v1509 = vpop.permute.xlu0 %1508
  %v1510 = vsel %vm567, %v1495, %v1503
  %v1511 = vsel %vm567, %v1497, %v1505
  %v1512 = vsel %vm567, %v1499, %v1507
  %v1513 = vsel %vm567, %v1501, %v1509
  %v1514 = vsel %vm567, %v1487, %v1495
  %v1515 = vsel %vm567, %v1489, %v1497
  %v1516 = vsel %vm567, %v1491, %v1499
  %v1517 = vsel %vm567, %v1493, %v1501
  %v1518 = vsel %vm567, %v1479, %v1487
  %v1519 = vsel %vm567, %v1481, %v1489
  %v1520 = vsel %vm567, %v1483, %v1491
  %v1521 = vsel %vm567, %v1485, %v1493
  %v1522 = vsel %vm567, %v1503, %v1479
  %v1523 = vsel %vm567, %v1505, %v1481
  %v1524 = vsel %vm567, %v1507, %v1483
  %v1525 = vsel %vm567, %v1509, %v1485
  %v1526 = vmul.f32 %v1518, %v587
  %v1527 = vmul.f32 %v1514, %v591
  %v1528 = vmul.f32 %v1510, %v595
  %v1529 = vmul.f32 %v1522, %v599
  %v1530 = vmul.f32 %v1519, %v587
  %v1531 = vmul.f32 %v1515, %v591
  %v1532 = vmul.f32 %v1511, %v595
  %v1533 = vmul.f32 %v1523, %v599
  %v1534 = vmul.f32 %v1520, %v587
  %v1535 = vmul.f32 %v1516, %v591
  %v1536 = vmul.f32 %v1512, %v595
  %v1537 = vmul.f32 %v1524, %v599
  %v1538 = vmul.f32 %v1521, %v587
  %v1539 = vmul.f32 %v1517, %v591
  %v1540 = vmul.f32 %v1513, %v595
  %v1541 = vmul.f32 %v1525, %v599
  %1542 = vrot.lane.b32.xlu0 %v1078, 111
  %v1543 = vpop.permute.xlu0 %1542
  %1544 = vrot.lane.b32.xlu0 %v1082, 111
  %v1545 = vpop.permute.xlu0 %1544
  %1546 = vrot.lane.b32.xlu0 %v1086, 111
  %v1547 = vpop.permute.xlu0 %1546
  %1548 = vrot.lane.b32.xlu0 %v1090, 111
  %v1549 = vpop.permute.xlu0 %1548
  %1550 = vrot.lane.b32.xlu0 %v1079, 111
  %v1551 = vpop.permute.xlu0 %1550
  %1552 = vrot.lane.b32.xlu0 %v1083, 111
  %v1553 = vpop.permute.xlu0 %1552
  %1554 = vrot.lane.b32.xlu0 %v1087, 111
  %v1555 = vpop.permute.xlu0 %1554
  %1556 = vrot.lane.b32.xlu0 %v1091, 111
  %v1557 = vpop.permute.xlu0 %1556
  %1558 = vrot.lane.b32.xlu0 %v1080, 111
  %v1559 = vpop.permute.xlu0 %1558
  %1560 = vrot.lane.b32.xlu0 %v1084, 111
  %v1561 = vpop.permute.xlu0 %1560
  %1562 = vrot.lane.b32.xlu0 %v1088, 111
  %v1563 = vpop.permute.xlu0 %1562
  %1564 = vrot.lane.b32.xlu0 %v1092, 111
  %v1565 = vpop.permute.xlu0 %1564
  %1566 = vrot.lane.b32.xlu0 %v1081, 111
  %v1567 = vpop.permute.xlu0 %1566
  %1568 = vrot.lane.b32.xlu0 %v1085, 111
  %v1569 = vpop.permute.xlu0 %1568
  %1570 = vrot.lane.b32.xlu0 %v1089, 111
  %v1571 = vpop.permute.xlu0 %1570
  %1572 = vrot.lane.b32.xlu0 %v1093, 111
  %v1573 = vpop.permute.xlu0 %1572
  %v1574 = vsel %vm648, %v1559, %v1567
  %v1575 = vsel %vm648, %v1561, %v1569
  %v1576 = vsel %vm648, %v1563, %v1571
  %v1577 = vsel %vm648, %v1565, %v1573
  %v1578 = vsel %vm648, %v1551, %v1559
  %v1579 = vsel %vm648, %v1553, %v1561
  %v1580 = vsel %vm648, %v1555, %v1563
  %v1581 = vsel %vm648, %v1557, %v1565
  %v1582 = vsel %vm648, %v1543, %v1551
  %v1583 = vsel %vm648, %v1545, %v1553
  %v1584 = vsel %vm648, %v1547, %v1555
  %v1585 = vsel %vm648, %v1549, %v1557
  %v1586 = vsel %vm648, %v1567, %v1543
  %v1587 = vsel %vm648, %v1569, %v1545
  %v1588 = vsel %vm648, %v1571, %v1547
  %v1589 = vsel %vm648, %v1573, %v1549
  %v1590 = vmul.f32 %v1582, %v668
  %v1591 = vmul.f32 %v1578, %v672
  %v1592 = vmul.f32 %v1574, %v676
  %v1593 = vmul.f32 %v1586, %v680
  %v1594 = vmul.f32 %v1583, %v668
  %v1595 = vmul.f32 %v1579, %v672
  %v1596 = vmul.f32 %v1575, %v676
  %v1597 = vmul.f32 %v1587, %v680
  %v1598 = vmul.f32 %v1584, %v668
  %v1599 = vmul.f32 %v1580, %v672
  %v1600 = vmul.f32 %v1576, %v676
  %v1601 = vmul.f32 %v1588, %v680
  %v1602 = vmul.f32 %v1585, %v668
  %v1603 = vmul.f32 %v1581, %v672
  %v1604 = vmul.f32 %v1577, %v676
  %v1605 = vmul.f32 %v1589, %v680
  %v1606 = vld [vmem:[%s3] sm:$0xff]
  %v1607 = vld [vmem:[%s3 + $0x8] sm:$0xff]
  %v1608 = vld [vmem:[%s3 + $0x10] sm:$0xff]
  %v1609 = vld [vmem:[%s3 + $0x18] sm:$0xff]
  %v1610 = vld [vmem:[%s3 + $0x20] sm:$0xff]
  %v1611 = vld [vmem:[%s3 + $0x28] sm:$0xff]
  %v1612 = vld [vmem:[%s3 + $0x30] sm:$0xff]
  %v1613 = vld [vmem:[%s3 + $0x38] sm:$0xff]
  %v1614 = vld [vmem:[%s3 + $0x40] sm:$0xff]
  %v1615 = vld [vmem:[%s3 + $0x48] sm:$0xff]
  %v1616 = vld [vmem:[%s3 + $0x50] sm:$0xff]
  %v1617 = vld [vmem:[%s3 + $0x58] sm:$0xff]
  %v1619 = vsel %vm709, %v1608, 0
  %v1622 = vsel %vm709, %v1611, 0
  %v1625 = vsel %vm709, %v1614, 0
  %v1628 = vsel %vm709, %v1617, 0
  %1630 = vmatprep.subr.mxu0 %v1143
  %1631 = vmatpush1.msra.mxu0 %v1142
  %1632 = vmatprep.subr.mxu0 %v1147
  %1633 = vmatpush1.msra.mxu0 %v1146
  %1634 = vmatprep.subr.mxu0 %v1151
  %1635 = vmatpush1.msra.mxu0 %v1150
  %1636 = vmatprep.subr.mxu0 %v1155
  %1637 = vmatpush1.msra.mxu0 %v1154
  %1638 = vmatprep.subr.mxu0 %v1207
  %1639 = vmatpush1.msra.mxu0 %v1206
  %1640 = vmatprep.subr.mxu0 %v1211
  %1641 = vmatpush1.msra.mxu0 %v1210
  %1642 = vmatprep.subr.mxu0 %v1215
  %1643 = vmatpush1.msra.mxu0 %v1214
  %1644 = vmatprep.subr.mxu0 %v1219
  %1645 = vmatpush1.msra.mxu0 %v1218
  %1646 = vmatprep.subr.mxu0 %v1271
  %1647 = vmatpush1.msra.mxu0 %v1270
  %1648 = vmatprep.subr.mxu0 %v1275
  %1649 = vmatpush1.msra.mxu0 %v1274
  %1650 = vmatprep.subr.mxu0 %v1279
  %1651 = vmatpush1.msra.mxu0 %v1278
  %1652 = vmatprep.subr.mxu0 %v1283
  %1653 = vmatpush1.msra.mxu0 %v1282
  %1654 = vmatprep.subr.mxu0 %v1335
  %1655 = vmatpush1.msra.mxu0 %v1334
  %1656 = vmatprep.subr.mxu0 %v1339
  %1657 = vmatpush1.msra.mxu0 %v1338
  %1658 = vmatprep.subr.mxu0 %v1343
  %1659 = vmatpush1.msra.mxu0 %v1342
  %1660 = vmatprep.subr.mxu0 %v1347
  %1661 = vmatpush1.msra.mxu0 %v1346
  %1662 = vmatprep.subr.mxu0 %v1079
  %1663 = vmatpush1.msra.mxu0 %v1078
  %1664 = vmatprep.subr.mxu0 %v1083
  %1665 = vmatpush1.msra.mxu0 %v1082
  %1666 = vmatprep.subr.mxu0 %v1087
  %1667 = vmatpush1.msra.mxu0 %v1086
  %1668 = vmatprep.subr.mxu0 %v1091
  %1669 = vmatpush1.msra.mxu0 %v1090
  %1670 = vmatprep.subr.mxu0 %v1399
  %1671 = vmatpush1.msra.mxu0 %v1398
  %1672 = vmatprep.subr.mxu0 %v1403
  %1673 = vmatpush1.msra.mxu0 %v1402
  %1674 = vmatprep.subr.mxu0 %v1407
  %1675 = vmatpush1.msra.mxu0 %v1406
  %1676 = vmatprep.subr.mxu0 %v1411
  %1677 = vmatpush1.msra.mxu0 %v1410
  %1678 = vmatprep.subr.mxu0 %v1463
  %1679 = vmatpush1.msra.mxu0 %v1462
  %1680 = vmatprep.subr.mxu0 %v1467
  %1681 = vmatpush1.msra.mxu0 %v1466
  %1682 = vmatprep.subr.mxu0 %v1471
  %1683 = vmatpush1.msra.mxu0 %v1470
  %1684 = vmatprep.subr.mxu0 %v1475
  %1685 = vmatpush1.msra.mxu0 %v1474
  %1686 = vmatprep.subr.mxu0 %v1527
  %1687 = vmatpush1.msra.mxu0 %v1526
  %1688 = vmatprep.subr.mxu0 %v1531
  %1689 = vmatpush1.msra.mxu0 %v1530
  %1690 = vmatprep.subr.mxu0 %v1535
  %1691 = vmatpush1.msra.mxu0 %v1534
  %1692 = vmatprep.subr.mxu0 %v1539
  %1693 = vmatpush1.msra.mxu0 %v1538
  %1694 = vmatprep.mubr.f32.mxu0 %v1607
  %1695 = vmatmul.mubr.f32.gmra.mrb[0].mxu0 %v1606
  %v1696 = vpop.f32.mrb[0].mxu0
  %v1697 = vadd.f32 0.0, %v1696
  %v1698 = vpop.f32.mrb[0].mxu0
  %v1699 = vadd.f32 0.0, %v1698
  %1700 = vmatprep.mubr.f32.mxu0 %v1610
  %1701 = vmatmul.mubr.f32.gmra.mrb[0].mxu0 %v1609
  %v1702 = vpop.f32.mrb[0].mxu0
  %v1703 = vadd.f32 0.0, %v1702
  %v1704 = vpop.f32.mrb[0].mxu0
  %v1705 = vadd.f32 0.0, %v1704
  %1706 = vmatprep.mubr.f32.mxu0 %v1613
  %1707 = vmatmul.mubr.f32.gmra.mrb[0].mxu0 %v1612
  %v1708 = vpop.f32.mrb[0].mxu0
  %v1709 = vadd.f32 0.0, %v1708
  %v1710 = vpop.f32.mrb[0].mxu0
  %v1711 = vadd.f32 0.0, %v1710
  %1712 = vmatprep.mubr.f32.mxu0 %v1616
  %1713 = vmatmul.mubr.f32.gmra.mrb[0].mxu0 %v1615
  %v1714 = vpop.f32.mrb[0].mxu0
  %v1715 = vadd.f32 0.0, %v1714
  %v1716 = vpop.f32.mrb[0].mxu0
  %v1717 = vadd.f32 0.0, %v1716
  %1718 = vdwg.mxu0
  %1719 = vmatprep.subr.mxu0 %v1591
  %1720 = vmatpush1.msra.mxu0 %v1590
  %1721 = vmatprep.subr.mxu0 %v1595
  %1722 = vmatpush1.msra.mxu0 %v1594
  %1723 = vmatprep.subr.mxu0 %v1599
  %1724 = vmatpush1.msra.mxu0 %v1598
  %1725 = vmatprep.subr.mxu0 %v1603
  %1726 = vmatpush1.msra.mxu0 %v1602
  %1727 = vmatprep.subr.mxu0 0.0
  %1728 = vmatpush1.msra.mxu0 0.0
  %1729 = vmatprep.subr.mxu0 0.0
  %1730 = vmatpush1.msra.mxu0 0.0
  %1731 = vmatprep.subr.mxu0 0.0
  %1732 = vmatpush1.msra.mxu0 0.0
  %1733 = vmatprep.subr.mxu0 0.0
  %1734 = vmatpush1.msra.mxu0 0.0
  %1735 = vmatprep.subr.mxu0 0.0
  %1736 = vmatpush1.msra.mxu0 0.0
  %1737 = vmatprep.subr.mxu0 0.0
  %1738 = vmatpush1.msra.mxu0 0.0
  %1739 = vmatprep.subr.mxu0 0.0
  %1740 = vmatpush1.msra.mxu0 0.0
  %1741 = vmatprep.subr.mxu0 0.0
  %1742 = vmatpush1.msra.mxu0 0.0
  %1743 = vmatprep.subr.mxu0 0.0
  %1744 = vmatpush1.msra.mxu0 0.0
  %1745 = vmatprep.subr.mxu0 0.0
  %1746 = vmatpush1.msra.mxu0 0.0
  %1747 = vmatprep.subr.mxu0 0.0
  %1748 = vmatpush1.msra.mxu0 0.0
  %1749 = vmatprep.subr.mxu0 0.0
  %1750 = vmatpush1.msra.mxu0 0.0
  %1751 = vmatprep.subr.mxu0 0.0
  %1752 = vmatpush1.msra.mxu0 0.0
  %1753 = vmatprep.subr.mxu0 0.0
  %1754 = vmatpush1.msra.mxu0 0.0
  %1755 = vmatprep.subr.mxu0 0.0
  %1756 = vmatpush1.msra.mxu0 0.0
  %1757 = vmatprep.subr.mxu0 0.0
  %1758 = vmatpush1.msra.mxu0 0.0
  %1759 = vmatprep.subr.mxu0 0.0
  %1760 = vmatpush1.msra.mxu0 0.0
  %1761 = vmatprep.subr.mxu0 0.0
  %1762 = vmatpush1.msra.mxu0 0.0
  %1763 = vmatprep.subr.mxu0 0.0
  %1764 = vmatpush1.msra.mxu0 0.0
  %1765 = vmatprep.subr.mxu0 0.0
  %1766 = vmatpush1.msra.mxu0 0.0
  %1767 = vmatprep.subr.mxu0 0.0
  %1768 = vmatpush1.msra.mxu0 0.0
  %1769 = vmatprep.subr.mxu0 0.0
  %1770 = vmatpush1.msra.mxu0 0.0
  %1771 = vmatprep.subr.mxu0 0.0
  %1772 = vmatpush1.msra.mxu0 0.0
  %1773 = vmatprep.subr.mxu0 0.0
  %1774 = vmatpush1.msra.mxu0 0.0
  %1775 = vmatprep.subr.mxu0 0.0
  %1776 = vmatpush1.msra.mxu0 0.0
  %1777 = vmatprep.subr.mxu0 0.0
  %1778 = vmatpush1.msra.mxu0 0.0
  %1779 = vmatprep.subr.mxu0 0.0
  %1780 = vmatpush1.msra.mxu0 0.0
  %1781 = vmatprep.subr.mxu0 0.0
  %1782 = vmatpush1.msra.mxu0 0.0
  %1783 = vmatprep.mubr.f32.mxu0 0.0
  %1784 = vmatmul.mubr.f32.gmra.mrb[0].mxu0 %v1619
  %v1785 = vpop.f32.mrb[0].mxu0
  %v1786 = vadd.f32 %v1697, %v1785
  %v1787 = vpop.f32.mrb[0].mxu0
  %v1788 = vadd.f32 %v1699, %v1787
  %1789 = vmatprep.mubr.f32.mxu0 0.0
  %1790 = vmatmul.mubr.f32.gmra.mrb[0].mxu0 %v1622
  %v1791 = vpop.f32.mrb[0].mxu0
  %v1792 = vadd.f32 %v1703, %v1791
  %v1793 = vpop.f32.mrb[0].mxu0
  %v1794 = vadd.f32 %v1705, %v1793
  %1795 = vmatprep.mubr.f32.mxu0 0.0
  %1796 = vmatmul.mubr.f32.gmra.mrb[0].mxu0 %v1625
  %v1797 = vpop.f32.mrb[0].mxu0
  %v1798 = vadd.f32 %v1709, %v1797
  %v1799 = vpop.f32.mrb[0].mxu0
  %v1800 = vadd.f32 %v1711, %v1799
  %1801 = vmatprep.mubr.f32.mxu0 0.0
  %1802 = vmatmul.mubr.f32.gmra.mrb[0].mxu0 %v1628
  %v1803 = vpop.f32.mrb[0].mxu0
  %v1804 = vadd.f32 %v1715, %v1803
  %v1805 = vpop.f32.mrb[0].mxu0
  %v1806 = vadd.f32 %v1717, %v1805
  %1807 = vdwg.mxu0
  %1808 = vmatprep.subr.mxu0 %v1145
  %1809 = vmatpush1.msra.mxu0 %v1144
  %1810 = vmatprep.subr.mxu0 %v1149
  %1811 = vmatpush1.msra.mxu0 %v1148
  %1812 = vmatprep.subr.mxu0 %v1153
  %1813 = vmatpush1.msra.mxu0 %v1152
  %1814 = vmatprep.subr.mxu0 %v1157
  %1815 = vmatpush1.msra.mxu0 %v1156
  %1816 = vmatprep.subr.mxu0 %v1209
  %1817 = vmatpush1.msra.mxu0 %v1208
  %1818 = vmatprep.subr.mxu0 %v1213
  %1819 = vmatpush1.msra.mxu0 %v1212
  %1820 = vmatprep.subr.mxu0 %v1217
  %1821 = vmatpush1.msra.mxu0 %v1216
  %1822 = vmatprep.subr.mxu0 %v1221
  %1823 = vmatpush1.msra.mxu0 %v1220
  %1824 = vmatprep.subr.mxu0 %v1273
  %1825 = vmatpush1.msra.mxu0 %v1272
  %1826 = vmatprep.subr.mxu0 %v1277
  %1827 = vmatpush1.msra.mxu0 %v1276
  %1828 = vmatprep.subr.mxu0 %v1281
  %1829 = vmatpush1.msra.mxu0 %v1280
  %1830 = vmatprep.subr.mxu0 %v1285
  %1831 = vmatpush1.msra.mxu0 %v1284
  %1832 = vmatprep.subr.mxu0 %v1337
  %1833 = vmatpush1.msra.mxu0 %v1336
  %1834 = vmatprep.subr.mxu0 %v1341
  %1835 = vmatpush1.msra.mxu0 %v1340
  %1836 = vmatprep.subr.mxu0 %v1345
  %1837 = vmatpush1.msra.mxu0 %v1344
  %1838 = vmatprep.subr.mxu0 %v1349
  %1839 = vmatpush1.msra.mxu0 %v1348
  %1840 = vmatprep.subr.mxu0 %v1081
  %1841 = vmatpush1.msra.mxu0 %v1080
  %1842 = vmatprep.subr.mxu0 %v1085
  %1843 = vmatpush1.msra.mxu0 %v1084
  %1844 = vmatprep.subr.mxu0 %v1089
  %1845 = vmatpush1.msra.mxu0 %v1088
  %1846 = vmatprep.subr.mxu0 %v1093
  %1847 = vmatpush1.msra.mxu0 %v1092
  %1848 = vmatprep.subr.mxu0 %v1401
  %1849 = vmatpush1.msra.mxu0 %v1400
  %1850 = vmatprep.subr.mxu0 %v1405
  %1851 = vmatpush1.msra.mxu0 %v1404
  %1852 = vmatprep.subr.mxu0 %v1409
  %1853 = vmatpush1.msra.mxu0 %v1408
  %1854 = vmatprep.subr.mxu0 %v1413
  %1855 = vmatpush1.msra.mxu0 %v1412
  %1856 = vmatprep.subr.mxu0 %v1465
  %1857 = vmatpush1.msra.mxu0 %v1464
  %1858 = vmatprep.subr.mxu0 %v1469
  %1859 = vmatpush1.msra.mxu0 %v1468
  %1860 = vmatprep.subr.mxu0 %v1473
  %1861 = vmatpush1.msra.mxu0 %v1472
  %1862 = vmatprep.subr.mxu0 %v1477
  %1863 = vmatpush1.msra.mxu0 %v1476
  %1864 = vmatprep.subr.mxu0 %v1529
  %1865 = vmatpush1.msra.mxu0 %v1528
  %1866 = vmatprep.subr.mxu0 %v1533
  %1867 = vmatpush1.msra.mxu0 %v1532
  %1868 = vmatprep.subr.mxu0 %v1537
  %1869 = vmatpush1.msra.mxu0 %v1536
  %1870 = vmatprep.subr.mxu0 %v1541
  %1871 = vmatpush1.msra.mxu0 %v1540
  %1872 = vmatprep.mubr.f32.mxu0 %v1607
  %1873 = vmatmul.mubr.f32.gmra.mrb[0].mxu0 %v1606
  %v1874 = vpop.f32.mrb[0].mxu0
  %v1875 = vadd.f32 0.0, %v1874
  %v1876 = vpop.f32.mrb[0].mxu0
  %v1877 = vadd.f32 0.0, %v1876
  %1878 = vmatprep.mubr.f32.mxu0 %v1610
  %1879 = vmatmul.mubr.f32.gmra.mrb[0].mxu0 %v1609
  %v1880 = vpop.f32.mrb[0].mxu0
  %v1881 = vadd.f32 0.0, %v1880
  %v1882 = vpop.f32.mrb[0].mxu0
  %v1883 = vadd.f32 0.0, %v1882
  %1884 = vmatprep.mubr.f32.mxu0 %v1613
  %1885 = vmatmul.mubr.f32.gmra.mrb[0].mxu0 %v1612
  %v1886 = vpop.f32.mrb[0].mxu0
  %v1887 = vadd.f32 0.0, %v1886
  %v1888 = vpop.f32.mrb[0].mxu0
  %v1889 = vadd.f32 0.0, %v1888
  %1890 = vmatprep.mubr.f32.mxu0 %v1616
  %1891 = vmatmul.mubr.f32.gmra.mrb[0].mxu0 %v1615
  %v1892 = vpop.f32.mrb[0].mxu0
  %v1893 = vadd.f32 0.0, %v1892
  %v1894 = vpop.f32.mrb[0].mxu0
  %v1895 = vadd.f32 0.0, %v1894
  %1896 = vdwg.mxu0
  %1897 = vmatprep.subr.mxu0 %v1593
  %1898 = vmatpush1.msra.mxu0 %v1592
  %1899 = vmatprep.subr.mxu0 %v1597
  %1900 = vmatpush1.msra.mxu0 %v1596
  %1901 = vmatprep.subr.mxu0 %v1601
  %1902 = vmatpush1.msra.mxu0 %v1600
  %1903 = vmatprep.subr.mxu0 %v1605
  %1904 = vmatpush1.msra.mxu0 %v1604
  %1905 = vmatprep.subr.mxu0 0.0
  %1906 = vmatpush1.msra.mxu0 0.0
  %1907 = vmatprep.subr.mxu0 0.0
  %1908 = vmatpush1.msra.mxu0 0.0
  %1909 = vmatprep.subr.mxu0 0.0
  %1910 = vmatpush1.msra.mxu0 0.0
  %1911 = vmatprep.subr.mxu0 0.0
  %1912 = vmatpush1.msra.mxu0 0.0
  %1913 = vmatprep.subr.mxu0 0.0
  %1914 = vmatpush1.msra.mxu0 0.0
  %1915 = vmatprep.subr.mxu0 0.0
  %1916 = vmatpush1.msra.mxu0 0.0
  %1917 = vmatprep.subr.mxu0 0.0
  %1918 = vmatpush1.msra.mxu0 0.0
  %1919 = vmatprep.subr.mxu0 0.0
  %1920 = vmatpush1.msra.mxu0 0.0
  %1921 = vmatprep.subr.mxu0 0.0
  %1922 = vmatpush1.msra.mxu0 0.0
  %1923 = vmatprep.subr.mxu0 0.0
  %1924 = vmatpush1.msra.mxu0 0.0
  %1925 = vmatprep.subr.mxu0 0.0
  %1926 = vmatpush1.msra.mxu0 0.0
  %1927 = vmatprep.subr.mxu0 0.0
  %1928 = vmatpush1.msra.mxu0 0.0
  %1929 = vmatprep.subr.mxu0 0.0
  %1930 = vmatpush1.msra.mxu0 0.0
  %1931 = vmatprep.subr.mxu0 0.0
  %1932 = vmatpush1.msra.mxu0 0.0
  %1933 = vmatprep.subr.mxu0 0.0
  %1934 = vmatpush1.msra.mxu0 0.0
  %1935 = vmatprep.subr.mxu0 0.0
  %1936 = vmatpush1.msra.mxu0 0.0
  %1937 = vmatprep.subr.mxu0 0.0
  %1938 = vmatpush1.msra.mxu0 0.0
  %1939 = vmatprep.subr.mxu0 0.0
  %1940 = vmatpush1.msra.mxu0 0.0
  %1941 = vmatprep.subr.mxu0 0.0
  %1942 = vmatpush1.msra.mxu0 0.0
  %1943 = vmatprep.subr.mxu0 0.0
  %1944 = vmatpush1.msra.mxu0 0.0
  %1945 = vmatprep.subr.mxu0 0.0
  %1946 = vmatpush1.msra.mxu0 0.0
  %1947 = vmatprep.subr.mxu0 0.0
  %1948 = vmatpush1.msra.mxu0 0.0
  %1949 = vmatprep.subr.mxu0 0.0
  %1950 = vmatpush1.msra.mxu0 0.0
  %1951 = vmatprep.subr.mxu0 0.0
  %1952 = vmatpush1.msra.mxu0 0.0
  %1953 = vmatprep.subr.mxu0 0.0
  %1954 = vmatpush1.msra.mxu0 0.0
  %1955 = vmatprep.subr.mxu0 0.0
  %1956 = vmatpush1.msra.mxu0 0.0
  %1957 = vmatprep.subr.mxu0 0.0
  %1958 = vmatpush1.msra.mxu0 0.0
  %1959 = vmatprep.subr.mxu0 0.0
  %1960 = vmatpush1.msra.mxu0 0.0
  %1961 = vmatprep.mubr.f32.mxu0 0.0
  %1962 = vmatmul.mubr.f32.gmra.mrb[0].mxu0 %v1619
  %v1963 = vpop.f32.mrb[0].mxu0
  %v1964 = vadd.f32 %v1875, %v1963
  %v1965 = vpop.f32.mrb[0].mxu0
  %v1966 = vadd.f32 %v1877, %v1965
  %1967 = vmatprep.mubr.f32.mxu0 0.0
  %1968 = vmatmul.mubr.f32.gmra.mrb[0].mxu0 %v1622
  %v1969 = vpop.f32.mrb[0].mxu0
  %v1970 = vadd.f32 %v1881, %v1969
  %v1971 = vpop.f32.mrb[0].mxu0
  %v1972 = vadd.f32 %v1883, %v1971
  %1973 = vmatprep.mubr.f32.mxu0 0.0
  %1974 = vmatmul.mubr.f32.gmra.mrb[0].mxu0 %v1625
  %v1975 = vpop.f32.mrb[0].mxu0
  %v1976 = vadd.f32 %v1887, %v1975
  %v1977 = vpop.f32.mrb[0].mxu0
  %v1978 = vadd.f32 %v1889, %v1977
  %1979 = vmatprep.mubr.f32.mxu0 0.0
  %1980 = vmatmul.mubr.f32.gmra.mrb[0].mxu0 %v1628
  %v1981 = vpop.f32.mrb[0].mxu0
  %v1982 = vadd.f32 %v1893, %v1981
  %v1983 = vpop.f32.mrb[0].mxu0
  %v1984 = vadd.f32 %v1895, %v1983
  %1985 = vdwg.mxu0
  %v1986 = vld [vmem:[%s4] sm:$0xff]
  %v1988 = vsel %vm709, %v1986, 0
  %1990 = vmatprep.subr.mxu0 %v1788
  %1991 = vmatpush1.msra.mxu0 %v1786
  %1992 = vmatprep.subr.mxu0 %v1794
  %1993 = vmatpush1.msra.mxu0 %v1792
  %1994 = vmatprep.subr.mxu0 %v1800
  %1995 = vmatpush1.msra.mxu0 %v1798
  %1996 = vmatprep.subr.mxu0 %v1806
  %1997 = vmatpush1.msra.mxu0 %v1804
  %1998 = vmatprep.subr.mxu0 0.0
  %1999 = vmatpush1.msra.mxu0 0.0
  %2000 = vmatprep.subr.mxu0 0.0
  %2001 = vmatpush1.msra.mxu0 0.0
  %2002 = vmatprep.subr.mxu0 0.0
  %2003 = vmatpush1.msra.mxu0 0.0
  %2004 = vmatprep.subr.mxu0 0.0
  %2005 = vmatpush1.msra.mxu0 0.0
  %2006 = vmatprep.subr.mxu0 0.0
  %2007 = vmatpush1.msra.mxu0 0.0
  %2008 = vmatprep.subr.mxu0 0.0
  %2009 = vmatpush1.msra.mxu0 0.0
  %2010 = vmatprep.subr.mxu0 0.0
  %2011 = vmatpush1.msra.mxu0 0.0
  %2012 = vmatprep.subr.mxu0 0.0
  %2013 = vmatpush1.msra.mxu0 0.0
  %2014 = vmatprep.subr.mxu0 0.0
  %2015 = vmatpush1.msra.mxu0 0.0
  %2016 = vmatprep.subr.mxu0 0.0
  %2017 = vmatpush1.msra.mxu0 0.0
  %2018 = vmatprep.subr.mxu0 0.0
  %2019 = vmatpush1.msra.mxu0 0.0
  %2020 = vmatprep.subr.mxu0 0.0
  %2021 = vmatpush1.msra.mxu0 0.0
  %2022 = vmatprep.subr.mxu0 0.0
  %2023 = vmatpush1.msra.mxu0 0.0
  %2024 = vmatprep.subr.mxu0 0.0
  %2025 = vmatpush1.msra.mxu0 0.0
  %2026 = vmatprep.subr.mxu0 0.0
  %2027 = vmatpush1.msra.mxu0 0.0
  %2028 = vmatprep.subr.mxu0 0.0
  %2029 = vmatpush1.msra.mxu0 0.0
  %2030 = vmatprep.subr.mxu0 0.0
  %2031 = vmatpush1.msra.mxu0 0.0
  %2032 = vmatprep.subr.mxu0 0.0
  %2033 = vmatpush1.msra.mxu0 0.0
  %2034 = vmatprep.subr.mxu0 0.0
  %2035 = vmatpush1.msra.mxu0 0.0
  %2036 = vmatprep.subr.mxu0 0.0
  %2037 = vmatpush1.msra.mxu0 0.0
  %2038 = vmatprep.subr.mxu0 0.0
  %2039 = vmatpush1.msra.mxu0 0.0
  %2040 = vmatprep.subr.mxu0 0.0
  %2041 = vmatpush1.msra.mxu0 0.0
  %2042 = vmatprep.subr.mxu0 0.0
  %2043 = vmatpush1.msra.mxu0 0.0
  %2044 = vmatprep.subr.mxu0 0.0
  %2045 = vmatpush1.msra.mxu0 0.0
  %2046 = vmatprep.subr.mxu0 0.0
  %2047 = vmatpush1.msra.mxu0 0.0
  %2048 = vmatprep.subr.mxu0 0.0
  %2049 = vmatpush1.msra.mxu0 0.0
  %2050 = vmatprep.subr.mxu0 0.0
  %2051 = vmatpush1.msra.mxu0 0.0
  %2052 = vmatprep.subr.mxu0 0.0
  %2053 = vmatpush1.msra.mxu0 0.0
  %2054 = vmatprep.mubr.f32.mxu0 0.0
  %2055 = vmatmul.mubr.f32.gmra.mrb[0].mxu0 %v1988
  %v2056 = vpop.f32.mrb[0].mxu0
  %v2057 = vadd.f32 0.0, %v2056
  %v2058 = vpop.f32.mrb[0].mxu0
  %v2059 = vadd.f32 0.0, %v2058
  %2060 = vdwg.mxu0
  %2061 = vmatprep.subr.mxu0 %v1966
  %2062 = vmatpush1.msra.mxu0 %v1964
  %2063 = vmatprep.subr.mxu0 %v1972
  %2064 = vmatpush1.msra.mxu0 %v1970
  %2065 = vmatprep.subr.mxu0 %v1978
  %2066 = vmatpush1.msra.mxu0 %v1976
  %2067 = vmatprep.subr.mxu0 %v1984
  %2068 = vmatpush1.msra.mxu0 %v1982
  %2069 = vmatprep.subr.mxu0 0.0
  %2070 = vmatpush1.msra.mxu0 0.0
  %2071 = vmatprep.subr.mxu0 0.0
  %2072 = vmatpush1.msra.mxu0 0.0
  %2073 = vmatprep.subr.mxu0 0.0
  %2074 = vmatpush1.msra.mxu0 0.0
  %2075 = vmatprep.subr.mxu0 0.0
  %2076 = vmatpush1.msra.mxu0 0.0
  %2077 = vmatprep.subr.mxu0 0.0
  %2078 = vmatpush1.msra.mxu0 0.0
  %2079 = vmatprep.subr.mxu0 0.0
  %2080 = vmatpush1.msra.mxu0 0.0
  %2081 = vmatprep.subr.mxu0 0.0
  %2082 = vmatpush1.msra.mxu0 0.0
  %2083 = vmatprep.subr.mxu0 0.0
  %2084 = vmatpush1.msra.mxu0 0.0
  %2085 = vmatprep.subr.mxu0 0.0
  %2086 = vmatpush1.msra.mxu0 0.0
  %2087 = vmatprep.subr.mxu0 0.0
  %2088 = vmatpush1.msra.mxu0 0.0
  %2089 = vmatprep.subr.mxu0 0.0
  %2090 = vmatpush1.msra.mxu0 0.0
  %2091 = vmatprep.subr.mxu0 0.0
  %2092 = vmatpush1.msra.mxu0 0.0
  %2093 = vmatprep.subr.mxu0 0.0
  %2094 = vmatpush1.msra.mxu0 0.0
  %2095 = vmatprep.subr.mxu0 0.0
  %2096 = vmatpush1.msra.mxu0 0.0
  %2097 = vmatprep.subr.mxu0 0.0
  %2098 = vmatpush1.msra.mxu0 0.0
  %2099 = vmatprep.subr.mxu0 0.0
  %2100 = vmatpush1.msra.mxu0 0.0
  %2101 = vmatprep.subr.mxu0 0.0
  %2102 = vmatpush1.msra.mxu0 0.0
  %2103 = vmatprep.subr.mxu0 0.0
  %2104 = vmatpush1.msra.mxu0 0.0
  %2105 = vmatprep.subr.mxu0 0.0
  %2106 = vmatpush1.msra.mxu0 0.0
  %2107 = vmatprep.subr.mxu0 0.0
  %2108 = vmatpush1.msra.mxu0 0.0
  %2109 = vmatprep.subr.mxu0 0.0
  %2110 = vmatpush1.msra.mxu0 0.0
  %2111 = vmatprep.subr.mxu0 0.0
  %2112 = vmatpush1.msra.mxu0 0.0
  %2113 = vmatprep.subr.mxu0 0.0
  %2114 = vmatpush1.msra.mxu0 0.0
  %2115 = vmatprep.subr.mxu0 0.0
  %2116 = vmatpush1.msra.mxu0 0.0
  %2117 = vmatprep.subr.mxu0 0.0
  %2118 = vmatpush1.msra.mxu0 0.0
  %2119 = vmatprep.subr.mxu0 0.0
  %2120 = vmatpush1.msra.mxu0 0.0
  %2121 = vmatprep.subr.mxu0 0.0
  %2122 = vmatpush1.msra.mxu0 0.0
  %2123 = vmatprep.subr.mxu0 0.0
  %2124 = vmatpush1.msra.mxu0 0.0
  %2125 = vmatprep.mubr.f32.mxu0 0.0
  %2126 = vmatmul.mubr.f32.gmra.mrb[0].mxu0 %v1988
  %v2127 = vpop.f32.mrb[0].mxu0
  %v2128 = vadd.f32 0.0, %v2127
  %v2129 = vpop.f32.mrb[0].mxu0
  %v2130 = vadd.f32 0.0, %v2129
  %2131 = vdwg.mxu0
  %v2132 = vmax.f32 %v2057, 0.0
  %v2133 = vmax.f32 %v2059, 0.0
  %v2134 = vmax.f32 %v2128, 0.0
  %v2135 = vmax.f32 %v2130, 0.0
  %v2136 = vld [vmem:[%s5] sm:$0xff]
  %v2137 = vld [vmem:[%s5 + $0x8] sm:$0xff]
  %v2138 = vld [vmem:[%s5 + $0x10] sm:$0xff]
  %v2139 = vld [vmem:[%s5 + $0x18] sm:$0xff]
  %vm2140 = vcmask 64512
  %v2142 = vsel %vm2140, %v2136, 0
  %v2145 = vsel %vm2140, %v2137, 0
  %v2148 = vsel %vm2140, %v2138, 0
  %v2151 = vsel %vm2140, %v2139, 0
  %2153 = vmatprep.subr.mxu0 %v2133
  %2154 = vmatpush1.msra.mxu0 %v2132
  %2155 = vmatprep.subr.mxu0 0.0
  %2156 = vmatpush1.msra.mxu0 0.0
  %2157 = vmatprep.subr.mxu0 0.0
  %2158 = vmatpush1.msra.mxu0 0.0
  %2159 = vmatprep.subr.mxu0 0.0
  %2160 = vmatpush1.msra.mxu0 0.0
  %2161 = vmatprep.subr.mxu0 0.0
  %2162 = vmatpush1.msra.mxu0 0.0
  %2163 = vmatprep.subr.mxu0 0.0
  %2164 = vmatpush1.msra.mxu0 0.0
  %2165 = vmatprep.subr.mxu0 0.0
  %2166 = vmatpush1.msra.mxu0 0.0
  %2167 = vmatprep.subr.mxu0 0.0
  %2168 = vmatpush1.msra.mxu0 0.0
  %2169 = vmatprep.subr.mxu0 0.0
  %2170 = vmatpush1.msra.mxu0 0.0
  %2171 = vmatprep.subr.mxu0 0.0
  %2172 = vmatpush1.msra.mxu0 0.0
  %2173 = vmatprep.subr.mxu0 0.0
  %2174 = vmatpush1.msra.mxu0 0.0
  %2175 = vmatprep.subr.mxu0 0.0
  %2176 = vmatpush1.msra.mxu0 0.0
  %2177 = vmatprep.subr.mxu0 0.0
  %2178 = vmatpush1.msra.mxu0 0.0
  %2179 = vmatprep.subr.mxu0 0.0
  %2180 = vmatpush1.msra.mxu0 0.0
  %2181 = vmatprep.subr.mxu0 0.0
  %2182 = vmatpush1.msra.mxu0 0.0
  %2183 = vmatprep.subr.mxu0 0.0
  %2184 = vmatpush1.msra.mxu0 0.0
  %2185 = vmatprep.subr.mxu0 0.0
  %2186 = vmatpush1.msra.mxu0 0.0
  %2187 = vmatprep.subr.mxu0 0.0
  %2188 = vmatpush1.msra.mxu0 0.0
  %2189 = vmatprep.subr.mxu0 0.0
  %2190 = vmatpush1.msra.mxu0 0.0
  %2191 = vmatprep.subr.mxu0 0.0
  %2192 = vmatpush1.msra.mxu0 0.0
  %2193 = vmatprep.subr.mxu0 0.0
  %2194 = vmatpush1.msra.mxu0 0.0
  %2195 = vmatprep.subr.mxu0 0.0
  %2196 = vmatpush1.msra.mxu0 0.0
  %2197 = vmatprep.subr.mxu0 0.0
  %2198 = vmatpush1.msra.mxu0 0.0
  %2199 = vmatprep.subr.mxu0 0.0
  %2200 = vmatpush1.msra.mxu0 0.0
  %2201 = vmatprep.subr.mxu0 0.0
  %2202 = vmatpush1.msra.mxu0 0.0
  %2203 = vmatprep.subr.mxu0 0.0
  %2204 = vmatpush1.msra.mxu0 0.0
  %2205 = vmatprep.subr.mxu0 0.0
  %2206 = vmatpush1.msra.mxu0 0.0
  %2207 = vmatprep.subr.mxu0 0.0
  %2208 = vmatpush1.msra.mxu0 0.0
  %2209 = vmatprep.subr.mxu0 0.0
  %2210 = vmatpush1.msra.mxu0 0.0
  %2211 = vmatprep.subr.mxu0 0.0
  %2212 = vmatpush1.msra.mxu0 0.0
  %2213 = vmatprep.subr.mxu0 0.0
  %2214 = vmatpush1.msra.mxu0 0.0
  %2215 = vmatprep.subr.mxu0 0.0
  %2216 = vmatpush1.msra.mxu0 0.0
  %2217 = vmatprep.mubr.f32.mxu0 0.0
  %2218 = vmatmul.mubr.f32.gmra.mrb[0].mxu0 %v2142
  %v2219 = vpop.f32.mrb[0].mxu0
  %v2220 = vadd.f32 0.0, %v2219
  %v2221 = vpop.f32.mrb[0].mxu0
  %v2222 = vadd.f32 0.0, %v2221
  %2223 = vmatprep.mubr.f32.mxu0 0.0
  %2224 = vmatmul.mubr.f32.gmra.mrb[0].mxu0 %v2145
  %v2225 = vpop.f32.mrb[0].mxu0
  %v2226 = vadd.f32 0.0, %v2225
  %v2227 = vpop.f32.mrb[0].mxu0
  %v2228 = vadd.f32 0.0, %v2227
  %2229 = vmatprep.mubr.f32.mxu0 0.0
  %2230 = vmatmul.mubr.f32.gmra.mrb[0].mxu0 %v2148
  %v2231 = vpop.f32.mrb[0].mxu0
  %v2232 = vadd.f32 0.0, %v2231
  %v2233 = vpop.f32.mrb[0].mxu0
  %v2234 = vadd.f32 0.0, %v2233
  %2235 = vmatprep.mubr.f32.mxu0 0.0
  %2236 = vmatmul.mubr.f32.gmra.mrb[0].mxu0 %v2151
  %v2237 = vpop.f32.mrb[0].mxu0
  %v2238 = vadd.f32 0.0, %v2237
  %v2239 = vpop.f32.mrb[0].mxu0
  %v2240 = vadd.f32 0.0, %v2239
  %2241 = vdwg.mxu0
  %2242 = vmatprep.subr.mxu0 %v2135
  %2243 = vmatpush1.msra.mxu0 %v2134
  %2244 = vmatprep.subr.mxu0 0.0
  %2245 = vmatpush1.msra.mxu0 0.0
  %2246 = vmatprep.subr.mxu0 0.0
  %2247 = vmatpush1.msra.mxu0 0.0
  %2248 = vmatprep.subr.mxu0 0.0
  %2249 = vmatpush1.msra.mxu0 0.0
  %2250 = vmatprep.subr.mxu0 0.0
  %2251 = vmatpush1.msra.mxu0 0.0
  %2252 = vmatprep.subr.mxu0 0.0
  %2253 = vmatpush1.msra.mxu0 0.0
  %2254 = vmatprep.subr.mxu0 0.0
  %2255 = vmatpush1.msra.mxu0 0.0
  %2256 = vmatprep.subr.mxu0 0.0
  %2257 = vmatpush1.msra.mxu0 0.0
  %2258 = vmatprep.subr.mxu0 0.0
  %2259 = vmatpush1.msra.mxu0 0.0
  %2260 = vmatprep.subr.mxu0 0.0
  %2261 = vmatpush1.msra.mxu0 0.0
  %2262 = vmatprep.subr.mxu0 0.0
  %2263 = vmatpush1.msra.mxu0 0.0
  %2264 = vmatprep.subr.mxu0 0.0
  %2265 = vmatpush1.msra.mxu0 0.0
  %2266 = vmatprep.subr.mxu0 0.0
  %2267 = vmatpush1.msra.mxu0 0.0
  %2268 = vmatprep.subr.mxu0 0.0
  %2269 = vmatpush1.msra.mxu0 0.0
  %2270 = vmatprep.subr.mxu0 0.0
  %2271 = vmatpush1.msra.mxu0 0.0
  %2272 = vmatprep.subr.mxu0 0.0
  %2273 = vmatpush1.msra.mxu0 0.0
  %2274 = vmatprep.subr.mxu0 0.0
  %2275 = vmatpush1.msra.mxu0 0.0
  %2276 = vmatprep.subr.mxu0 0.0
  %2277 = vmatpush1.msra.mxu0 0.0
  %2278 = vmatprep.subr.mxu0 0.0
  %2279 = vmatpush1.msra.mxu0 0.0
  %2280 = vmatprep.subr.mxu0 0.0
  %2281 = vmatpush1.msra.mxu0 0.0
  %2282 = vmatprep.subr.mxu0 0.0
  %2283 = vmatpush1.msra.mxu0 0.0
  %2284 = vmatprep.subr.mxu0 0.0
  %2285 = vmatpush1.msra.mxu0 0.0
  %2286 = vmatprep.subr.mxu0 0.0
  %2287 = vmatpush1.msra.mxu0 0.0
  %2288 = vmatprep.subr.mxu0 0.0
  %2289 = vmatpush1.msra.mxu0 0.0
  %2290 = vmatprep.subr.mxu0 0.0
  %2291 = vmatpush1.msra.mxu0 0.0
  %2292 = vmatprep.subr.mxu0 0.0
  %2293 = vmatpush1.msra.mxu0 0.0
  %2294 = vmatprep.subr.mxu0 0.0
  %2295 = vmatpush1.msra.mxu0 0.0
  %2296 = vmatprep.subr.mxu0 0.0
  %2297 = vmatpush1.msra.mxu0 0.0
  %2298 = vmatprep.subr.mxu0 0.0
  %2299 = vmatpush1.msra.mxu0 0.0
  %2300 = vmatprep.subr.mxu0 0.0
  %2301 = vmatpush1.msra.mxu0 0.0
  %2302 = vmatprep.subr.mxu0 0.0
  %2303 = vmatpush1.msra.mxu0 0.0
  %2304 = vmatprep.subr.mxu0 0.0
  %2305 = vmatpush1.msra.mxu0 0.0
  %2306 = vmatprep.mubr.f32.mxu0 0.0
  %2307 = vmatmul.mubr.f32.gmra.mrb[0].mxu0 %v2142
  %v2308 = vpop.f32.mrb[0].mxu0
  %v2309 = vadd.f32 0.0, %v2308
  %v2310 = vpop.f32.mrb[0].mxu0
  %v2311 = vadd.f32 0.0, %v2310
  %2312 = vmatprep.mubr.f32.mxu0 0.0
  %2313 = vmatmul.mubr.f32.gmra.mrb[0].mxu0 %v2145
  %v2314 = vpop.f32.mrb[0].mxu0
  %v2315 = vadd.f32 0.0, %v2314
  %v2316 = vpop.f32.mrb[0].mxu0
  %v2317 = vadd.f32 0.0, %v2316
  %2318 = vmatprep.mubr.f32.mxu0 0.0
  %2319 = vmatmul.mubr.f32.gmra.mrb[0].mxu0 %v2148
  %v2320 = vpop.f32.mrb[0].mxu0
  %v2321 = vadd.f32 0.0, %v2320
  %v2322 = vpop.f32.mrb[0].mxu0
  %v2323 = vadd.f32 0.0, %v2322
  %2324 = vmatprep.mubr.f32.mxu0 0.0
  %2325 = vmatmul.mubr.f32.gmra.mrb[0].mxu0 %v2151
  %v2326 = vpop.f32.mrb[0].mxu0
  %v2327 = vadd.f32 0.0, %v2326
  %v2328 = vpop.f32.mrb[0].mxu0
  %v2329 = vadd.f32 0.0, %v2328
  %2330 = vdwg.mxu0
  %v2331 = vmul.f32 %v2220, 0.5
  %v2332 = vmul.f32 %v2222, 0.5
  %v2333 = vmul.f32 %v2309, 0.5
  %v2334 = vmul.f32 %v2311, 0.5
  %v2335 = vmul.f32 %v2226, 0.5
  %v2336 = vmul.f32 %v2228, 0.5
  %v2337 = vmul.f32 %v2315, 0.5
  %v2338 = vmul.f32 %v2317, 0.5
  %v2339 = vmul.f32 %v2232, 0.5
  %v2340 = vmul.f32 %v2234, 0.5
  %v2341 = vmul.f32 %v2321, 0.5
  %v2342 = vmul.f32 %v2323, 0.5
  %v2343 = vmul.f32 %v2238, 0.5
  %v2344 = vmul.f32 %v2240, 0.5
  %v2345 = vmul.f32 %v2327, 0.5
  %v2346 = vmul.f32 %v2329, 0.5
  %v2347 = vtanh.pop %v2331
  %v2348 = vtanh.pop %v2332
  %v2349 = vtanh.pop %v2333
  %v2350 = vtanh.pop %v2334
  %v2351 = vtanh.pop %v2335
  %v2352 = vtanh.pop %v2336
  %v2353 = vtanh.pop %v2337
  %v2354 = vtanh.pop %v2338
  %v2355 = vtanh.pop %v2339
  %v2356 = vtanh.pop %v2340
  %v2357 = vtanh.pop %v2341
  %v2358 = vtanh.pop %v2342
  %v2359 = vtanh.pop %v2343
  %v2360 = vtanh.pop %v2344
  %v2361 = vtanh.pop %v2345
  %v2362 = vtanh.pop %v2346
  %v2363 = vadd.f32 %v2347, 1.0
  %v2364 = vadd.f32 %v2348, 1.0
  %v2365 = vadd.f32 %v2349, 1.0
  %v2366 = vadd.f32 %v2350, 1.0
  %v2367 = vadd.f32 %v2351, 1.0
  %v2368 = vadd.f32 %v2352, 1.0
  %v2369 = vadd.f32 %v2353, 1.0
  %v2370 = vadd.f32 %v2354, 1.0
  %v2371 = vadd.f32 %v2355, 1.0
  %v2372 = vadd.f32 %v2356, 1.0
  %v2373 = vadd.f32 %v2357, 1.0
  %v2374 = vadd.f32 %v2358, 1.0
  %v2375 = vadd.f32 %v2359, 1.0
  %v2376 = vadd.f32 %v2360, 1.0
  %v2377 = vadd.f32 %v2361, 1.0
  %v2378 = vadd.f32 %v2362, 1.0
  %v2379 = vmul.f32 %v2363, 0.5
  %v2380 = vmul.f32 %v2364, 0.5
  %v2381 = vmul.f32 %v2365, 0.5
  %v2382 = vmul.f32 %v2366, 0.5
  %v2383 = vmul.f32 %v2367, 0.5
  %v2384 = vmul.f32 %v2368, 0.5
  %v2385 = vmul.f32 %v2369, 0.5
  %v2386 = vmul.f32 %v2370, 0.5
  %v2387 = vmul.f32 %v2371, 0.5
  %v2388 = vmul.f32 %v2372, 0.5
  %v2389 = vmul.f32 %v2373, 0.5
  %v2390 = vmul.f32 %v2374, 0.5
  %v2391 = vmul.f32 %v2375, 0.5
  %v2392 = vmul.f32 %v2376, 0.5
  %v2393 = vmul.f32 %v2377, 0.5
  %v2394 = vmul.f32 %v2378, 0.5
  %v2395 = vmul.f32 %v1786, %v2379
  %v2396 = vmul.f32 %v1788, %v2380
  %v2397 = vmul.f32 %v1964, %v2381
  %v2398 = vmul.f32 %v1966, %v2382
  %v2399 = vmul.f32 %v1792, %v2383
  %v2400 = vmul.f32 %v1794, %v2384
  %v2401 = vmul.f32 %v1970, %v2385
  %v2402 = vmul.f32 %v1972, %v2386
  %v2403 = vmul.f32 %v1798, %v2387
  %v2404 = vmul.f32 %v1800, %v2388
  %v2405 = vmul.f32 %v1976, %v2389
  %v2406 = vmul.f32 %v1978, %v2390
  %v2407 = vmul.f32 %v1804, %v2391
  %v2408 = vmul.f32 %v1806, %v2392
  %v2409 = vmul.f32 %v1982, %v2393
  %v2410 = vmul.f32 %v1984, %v2394
  %v2411 = vadd.f32 %v2395, %v23
  %v2412 = vadd.f32 %v2396, %v24
  %v2413 = vadd.f32 %v2397, %v25
  %v2414 = vadd.f32 %v2398, %v26
  %v2415 = vadd.f32 %v2399, %v27
  %v2416 = vadd.f32 %v2400, %v28
  %v2417 = vadd.f32 %v2401, %v29
  %v2418 = vadd.f32 %v2402, %v30
  %v2419 = vadd.f32 %v2403, %v31
  %v2420 = vadd.f32 %v2404, %v32
  %v2421 = vadd.f32 %v2405, %v33
  %v2422 = vadd.f32 %v2406, %v34
  %v2423 = vadd.f32 %v2407, %v35
  %v2424 = vadd.f32 %v2408, %v36
  %v2425 = vadd.f32 %v2409, %v37
  %v2426 = vadd.f32 %v2410, %v38
  %2427 = vst [vmem:[%s6] sm:$0xff] %v2411
  %2428 = vst [vmem:[%s6 + $0x8] sm:$0xff] %v2412
  %2429 = vst [vmem:[%s6 + $0x10] sm:$0xff] %v2413
  %2430 = vst [vmem:[%s6 + $0x18] sm:$0xff] %v2414
  %2431 = vst [vmem:[%s6 + $0x20] sm:$0xff] %v2415
  %2432 = vst [vmem:[%s6 + $0x28] sm:$0xff] %v2416
  %2433 = vst [vmem:[%s6 + $0x30] sm:$0xff] %v2417
  %2434 = vst [vmem:[%s6 + $0x38] sm:$0xff] %v2418
  %2435 = vst [vmem:[%s6 + $0x40] sm:$0xff] %v2419
  %2436 = vst [vmem:[%s6 + $0x48] sm:$0xff] %v2420
  %2437 = vst [vmem:[%s6 + $0x50] sm:$0xff] %v2421
  %2438 = vst [vmem:[%s6 + $0x58] sm:$0xff] %v2422
  %2439 = vst [vmem:[%s6 + $0x60] sm:$0xff] %v2423
  %2440 = vst [vmem:[%s6 + $0x68] sm:$0xff] %v2424
  %2441 = vst [vmem:[%s6 + $0x70] sm:$0xff] %v2425
  %2442 = vst [vmem:[%s6 + $0x78] sm:$0xff] %v2426
  // Predicated region
  $region26: #{pab_forward.1} parent=0 // pred_check
    _
  $region27: #{pab_forward.1} parent=0 // pred_check_branch
    %2444 = sbr.rel (0) target = $region29
  $region28: #{pab_forward.1} parent=0 // pred_region
    _
  $region29: #{pab_forward.1} parent=0 // pred_fallthru
    _
  // Predicated region
  $region30: #{pab_forward.1} parent=0 // pred_check
    _
  $region31: #{pab_forward.1} parent=0 // pred_check_branch
    %2446 = sbr.rel (0) target = $region33
  $region32: #{pab_forward.1} parent=0 // pred_region
    _
  $region33: #{pab_forward.1} parent=0 // pred_fallthru
    _

</llo_original>
